<compile_context>
chip_gen: v6e
topology: v6e:2x2x1
jax: 0.10.0
libtpu: 0.0.40
codegen_flags: <defaults>
</compile_context>

<pallas_src>
import functools
import math

import jax
import jax.numpy as jnp
from jax.experimental import pallas as pl
from jax.experimental.pallas import tpu as pltpu


def bert_self_attention_kernel(x_ref, bias_ref, wqkv_ref, bqkv_ref, out_ref,
                               *, num_heads, head_size):
    T = x_ref.shape[1]
    C = x_ref.shape[2]

    # Fused QKV projection on the MXU: bf16 operands, f32 accumulation.
    x = x_ref[0].astype(jnp.bfloat16)                                # (T, C)
    qkv = jnp.dot(x, wqkv_ref[...], preferred_element_type=jnp.float32)
    qkv = qkv + bqkv_ref[...]                                        # (T, 3C) f32

    # 1/sqrt(head_size) was folded into the query weight/bias in the wrapper.
    q = qkv[:, 0:C].astype(jnp.bfloat16)                             # (T, C)
    k = qkv[:, C:2 * C].astype(jnp.bfloat16)
    v = qkv[:, 2 * C:3 * C].astype(jnp.bfloat16)

    # Additive key-padding mask: 0 = attend, -1e30 = masked; broadcast over rows.
    mask_bias = bias_ref[0]                                          # (1, T) f32

    for h in range(num_heads):
        lo = h * head_size
        hi = lo + head_size
        q_h = q[:, lo:hi]                                            # (T, hs)
        k_h = k[:, lo:hi]
        v_h = v[:, lo:hi]

        # scores = q_h @ k_h^T (bf16 in, f32 acc), no materialized transpose.
        s = jax.lax.dot_general(q_h, k_h, (((1,), (1,)), ((), ())),
                                preferred_element_type=jnp.float32)  # (T, T)
        s = s + mask_bias

        # Numerically stable softmax; exp and reciprocal go to the EUP slot.
        m = jnp.max(s, axis=-1, keepdims=True)                       # (T, 1)
        p = jnp.exp(s - m)                                           # (T, T)
        denom = jnp.sum(p, axis=-1, keepdims=True)                   # (T, 1)
        inv = pl.reciprocal(denom, approx=True)                      # (T, 1)

        # dropout(attention_probs) is identity in eval mode.
        ctx = jnp.dot(p.astype(jnp.bfloat16), v_h,
                      preferred_element_type=jnp.float32)            # (T, hs)

        # Write this head's context straight into its lane range of the output
        # block — no concat, no extra live temporaries.
        out_ref[0, :, lo:hi] = (ctx * inv).astype(out_ref.dtype)


def _build_attention_call(B, T, C, num_heads, head_size, out_dtype,
                          single_buffer_weights):
    kernel = functools.partial(bert_self_attention_kernel,
                               num_heads=num_heads, head_size=head_size)

    if single_buffer_weights:
        # Weights/bias never change across the grid (constant index_map):
        # request a single pipeline buffer to avoid a second resident copy.
        w_spec = pl.BlockSpec((C, 3 * C), lambda b: (0, 0),
                              pipeline_mode=pl.Buffered(1))
        b_spec = pl.BlockSpec((1, 3 * C), lambda b: (0, 0),
                              pipeline_mode=pl.Buffered(1))
    else:
        w_spec = pl.BlockSpec((C, 3 * C), lambda b: (0, 0))
        b_spec = pl.BlockSpec((1, 3 * C), lambda b: (0, 0))

    cost = pl.CostEstimate(
        flops=2 * B * T * C * (3 * C) + 4 * B * T * T * C,
        transcendentals=B * num_heads * T * (T + 1),
        bytes_accessed=(4 * (2 * B * T * C + B * T + 3 * C) + 2 * 3 * C * C),
    )

    return pl.pallas_call(
        kernel,
        out_shape=jax.ShapeDtypeStruct((B, T, C), out_dtype),
        grid=(B,),
        in_specs=[
            pl.BlockSpec((1, T, C), lambda b: (b, 0, 0)),   # hidden_states
            pl.BlockSpec((1, 1, T), lambda b: (b, 0, 0)),   # additive mask bias
            w_spec,                                          # fused QKV weight (bf16)
            b_spec,                                          # fused QKV bias (f32)
        ],
        out_specs=pl.BlockSpec((1, T, C), lambda b: (b, 0, 0)),
        compiler_params=pltpu.CompilerParams(
            dimension_semantics=("parallel",),
            vmem_limit_bytes=48 * 1024 * 1024),
        cost_estimate=cost,
    )


def bert_self_attention(hidden_states, attention_mask,
                        wq, bq, wk, bk, wv, bv, num_heads):
    """hidden_states: (B, T, C) f32; attention_mask: (B, T) {0,1};
    wq/wk/wv: (C, C) torch nn.Linear layout (out, in); bq/bk/bv: (C,)."""
    B, T, C = hidden_states.shape
    if C % num_heads != 0:
        raise ValueError(
            'The hidden size (%d) is not a multiple of the number of attention '
            'heads (%d)' % (C, num_heads))
    head_size = C // num_heads
    scale = 1.0 / math.sqrt(head_size)

    # Wrapper-side layout plumbing (done once, not per grid step):
    #  * fuse the three projections, fold the 1/sqrt(hs) scale into Q,
    #  * ship the weight in bf16 (MXU-native on v5e/v6e/v7x),
    #  * turn the 0/1 key mask into an additive f32 bias (0 / -1e30).
    w_qkv = jnp.concatenate([wq.T * scale, wk.T, wv.T],
                            axis=1).astype(jnp.bfloat16)             # (C, 3C)
    b_qkv = jnp.concatenate([bq * scale, bk, bv],
                            axis=0)[None, :].astype(jnp.float32)     # (1, 3C)
    mask_bias = ((1.0 - attention_mask.astype(jnp.float32))
                 * jnp.float32(-1e30)).reshape(B, 1, T)               # (B, 1, T)

    last_err = None
    for single_buffer_weights in (True, False):
        try:
            call = _build_attention_call(B, T, C, num_heads, head_size,
                                         hidden_states.dtype,
                                         single_buffer_weights)
            return call(hidden_states, mask_bias, w_qkv, b_qkv)
        except Exception as e:  # pl.Buffered(1) unsupported -> default buffering
            last_err = e
            if not single_buffer_weights:
                raise
    raise last_err


def _reference(hidden_states, attention_mask, wq, bq, wk, bk, wv, bv, num_heads):
    B, T, C = hidden_states.shape
    hs = C // num_heads

    q = hidden_states @ wq.T + bq
    k = hidden_states @ wk.T + bk
    v = hidden_states @ wv.T + bv

    def split(x):
        return x.reshape(B, T, num_heads, hs).transpose(0, 2, 1, 3)  # (B,H,T,hs)

    q, k, v = split(q), split(k), split(v)
    s = jnp.einsum('bhqd,bhkd->bhqk', q, k) / math.sqrt(hs)
    m = attention_mask[:, None, None, :]
    s = jnp.where(m == 0, -jnp.inf, s)
    p = jax.nn.softmax(s, axis=-1)
    ctx = jnp.einsum('bhqk,bhkd->bhqd', p, v)
    return ctx.transpose(0, 2, 1, 3).reshape(B, T, C)


if __name__ == "__main__":
    # Small config: batch=2, seq=8, hidden=32, heads=4 (head_size=8).
    B, T, C, H = 2, 8, 32, 4

    key = jax.random.PRNGKey(0)
    k1, k2, k3, k4, k5, k6, k7 = jax.random.split(key, 7)
    hidden = jax.random.normal(k1, (B, T, C), jnp.float32) * 0.5
    wq = jax.random.normal(k2, (C, C), jnp.float32) * 0.1
    wk = jax.random.normal(k3, (C, C), jnp.float32) * 0.1
    wv = jax.random.normal(k4, (C, C), jnp.float32) * 0.1
    bq = jax.random.normal(k5, (C,), jnp.float32) * 0.1
    bk = jax.random.normal(k6, (C,), jnp.float32) * 0.1
    bv = jax.random.normal(k7, (C,), jnp.float32) * 0.1

    # attention_mask: 1 = attend, 0 = padding (pad the last 2 keys of batch 1).
    attention_mask = jnp.ones((B, T), jnp.int32)
    attention_mask = attention_mask.at[1, T - 2:].set(0)

    out = bert_self_attention(hidden, attention_mask,
                              wq, bq, wk, bk, wv, bv, H)
    out = jax.block_until_ready(out)

    ref = _reference(hidden, attention_mask, wq, bq, wk, bk, wv, bv, H)
    assert out.shape == (B, T, C)
    # bf16 MXU operands + approx reciprocal -> compare with loosened tolerance.
    assert bool(jnp.allclose(out, ref, atol=2e-2, rtol=2e-2))
    print("KERNEL_OK")
</pallas_src>

<mosaic_0001>
module attributes {stable_mosaic.version = 11 : i64} {
  func.func @bert_self_attention_kernel(%arg0: i32, %arg1: memref<1x8x32xf32, #tpu.memory_space<vmem>>, %arg2: memref<1x1x8xf32, #tpu.memory_space<vmem>>, %arg3: memref<32x96xbf16, #tpu.memory_space<vmem>>, %arg4: memref<1x96xf32, #tpu.memory_space<vmem>>, %arg5: memref<1x8x32xf32, #tpu.memory_space<vmem>>) attributes {dimension_semantics = [#tpu.dimension_semantics<parallel>], iteration_bounds = array<i64: 2>, scalar_prefetch = 0 : i64, scratch_operands = 0 : i64, tpu.core_type = #tpu.core_type<tc>, window_params = [{transform_indices = @transform_0, window_bounds = array<i64: 1, 8, 32>}, {transform_indices = @transform_1, window_bounds = array<i64: 1, 1, 8>}, {pipeline_mode = #tpu.pipeline_mode<synchronous>, transform_indices = @transform_2, window_bounds = array<i64: 32, 96>}, {pipeline_mode = #tpu.pipeline_mode<synchronous>, transform_indices = @transform_3, window_bounds = array<i64: 1, 96>}, {transform_indices = @transform_4, window_bounds = array<i64: 1, 8, 32>}]} {
    %c0 = arith.constant 0 : index
    %c0_0 = arith.constant 0 : index
    %c0_1 = arith.constant 0 : index
    %0 = vector.load %arg1[%c0, %c0_0, %c0_1] : memref<1x8x32xf32, #tpu.memory_space<vmem>>, vector<1x8x32xf32>
    %1 = vector.shape_cast %0 : vector<1x8x32xf32> to vector<8x32xf32>
    %2 = arith.truncf %1 : vector<8x32xf32> to vector<8x32xbf16>
    %c0_2 = arith.constant 0 : index
    %c0_3 = arith.constant 0 : index
    %3 = vector.load %arg3[%c0_2, %c0_3] : memref<32x96xbf16, #tpu.memory_space<vmem>>, vector<32x96xbf16>
    %cst = arith.constant dense<0.000000e+00> : vector<8x96xf32>
    %4 = tpu.matmul %2, %3, %cst {dimension_numbers = #tpu.dot_dimension_numbers<[1], [0], [0], [1], [0, 0, 1, 1], [], []>} : vector<8x32xbf16>, vector<32x96xbf16>, vector<8x96xf32> -> vector<8x96xf32>
    %c0_4 = arith.constant 0 : index
    %c0_5 = arith.constant 0 : index
    %5 = vector.load %arg4[%c0_4, %c0_5] : memref<1x96xf32, #tpu.memory_space<vmem>>, vector<1x96xf32>
    %6 = vector.broadcast %5 : vector<1x96xf32> to vector<8x96xf32>
    %7 = arith.addf %4, %6 : vector<8x96xf32>
    %8 = vector.extract_strided_slice %7 {offsets = [0, 0], sizes = [8, 32], strides = [1, 1]} : vector<8x96xf32> to vector<8x32xf32>
    %9 = arith.truncf %8 : vector<8x32xf32> to vector<8x32xbf16>
    %10 = vector.extract_strided_slice %7 {offsets = [0, 32], sizes = [8, 32], strides = [1, 1]} : vector<8x96xf32> to vector<8x32xf32>
    %11 = arith.truncf %10 : vector<8x32xf32> to vector<8x32xbf16>
    %12 = vector.extract_strided_slice %7 {offsets = [0, 64], sizes = [8, 32], strides = [1, 1]} : vector<8x96xf32> to vector<8x32xf32>
    %13 = arith.truncf %12 : vector<8x32xf32> to vector<8x32xbf16>
    %c0_6 = arith.constant 0 : index
    %c0_7 = arith.constant 0 : index
    %c0_8 = arith.constant 0 : index
    %14 = vector.load %arg2[%c0_6, %c0_7, %c0_8] : memref<1x1x8xf32, #tpu.memory_space<vmem>>, vector<1x1x8xf32>
    %15 = vector.shape_cast %14 : vector<1x1x8xf32> to vector<1x8xf32>
    %16 = vector.extract_strided_slice %9 {offsets = [0, 0], sizes = [8, 8], strides = [1, 1]} : vector<8x32xbf16> to vector<8x8xbf16>
    %17 = vector.extract_strided_slice %11 {offsets = [0, 0], sizes = [8, 8], strides = [1, 1]} : vector<8x32xbf16> to vector<8x8xbf16>
    %18 = vector.extract_strided_slice %13 {offsets = [0, 0], sizes = [8, 8], strides = [1, 1]} : vector<8x32xbf16> to vector<8x8xbf16>
    %cst_9 = arith.constant dense<0.000000e+00> : vector<8x8xf32>
    %19 = tpu.matmul %16, %17, %cst_9 {dimension_numbers = #tpu.dot_dimension_numbers<[1], [1], [0], [0], [0, 0, 1, 0], [], []>} : vector<8x8xbf16>, vector<8x8xbf16>, vector<8x8xf32> -> vector<8x8xf32>
    %20 = vector.broadcast %15 : vector<1x8xf32> to vector<8x8xf32>
    %21 = arith.addf %19, %20 : vector<8x8xf32>
    %cst_10 = arith.constant dense<0xFF800000> : vector<8xf32>
    %22 = vector.multi_reduction <maximumf>, %21, %cst_10 [1] : vector<8x8xf32> to vector<8xf32>
    %23 = vector.shape_cast %22 : vector<8xf32> to vector<8x1xf32>
    %24 = vector.broadcast %23 : vector<8x1xf32> to vector<8x8xf32>
    %25 = arith.subf %21, %24 : vector<8x8xf32>
    %26 = math.exp %25 : vector<8x8xf32>
    %cst_11 = arith.constant dense<0.000000e+00> : vector<8xf32>
    %27 = vector.multi_reduction <add>, %26, %cst_11 [1] : vector<8x8xf32> to vector<8xf32>
    %28 = vector.shape_cast %27 : vector<8xf32> to vector<8x1xf32>
    %29 = tpu.reciprocal %28 {approx = true} : vector<8x1xf32> -> vector<8x1xf32>
    %30 = arith.truncf %26 : vector<8x8xf32> to vector<8x8xbf16>
    %cst_12 = arith.constant dense<0.000000e+00> : vector<8x8xf32>
    %31 = tpu.matmul %30, %18, %cst_12 {dimension_numbers = #tpu.dot_dimension_numbers<[1], [0], [0], [1], [0, 0, 1, 1], [], []>} : vector<8x8xbf16>, vector<8x8xbf16>, vector<8x8xf32> -> vector<8x8xf32>
    %32 = vector.broadcast %29 : vector<8x1xf32> to vector<8x8xf32>
    %33 = arith.mulf %31, %32 : vector<8x8xf32>
    %c0_13 = arith.constant 0 : index
    %c0_14 = arith.constant 0 : index
    %c0_15 = arith.constant 0 : index
    %34 = vector.load %arg5[%c0_13, %c0_14, %c0_15] : memref<1x8x32xf32, #tpu.memory_space<vmem>>, vector<1x8x8xf32>
    %35 = vector.shape_cast %34 : vector<1x8x8xf32> to vector<8x8xf32>
    %36 = vector.shape_cast %33 : vector<8x8xf32> to vector<1x8x8xf32>
    tpu.vector_store %arg5[%c0_13, %c0_14, %c0_15], %36 {strides = array<i32>} : memref<1x8x32xf32, #tpu.memory_space<vmem>>, vector<1x8x8xf32>,
    %37 = vector.extract_strided_slice %9 {offsets = [0, 8], sizes = [8, 8], strides = [1, 1]} : vector<8x32xbf16> to vector<8x8xbf16>
    %38 = vector.extract_strided_slice %11 {offsets = [0, 8], sizes = [8, 8], strides = [1, 1]} : vector<8x32xbf16> to vector<8x8xbf16>
    %39 = vector.extract_strided_slice %13 {offsets = [0, 8], sizes = [8, 8], strides = [1, 1]} : vector<8x32xbf16> to vector<8x8xbf16>
    %cst_16 = arith.constant dense<0.000000e+00> : vector<8x8xf32>
    %40 = tpu.matmul %37, %38, %cst_16 {dimension_numbers = #tpu.dot_dimension_numbers<[1], [1], [0], [0], [0, 0, 1, 0], [], []>} : vector<8x8xbf16>, vector<8x8xbf16>, vector<8x8xf32> -> vector<8x8xf32>
    %41 = vector.broadcast %15 : vector<1x8xf32> to vector<8x8xf32>
    %42 = arith.addf %40, %41 : vector<8x8xf32>
    %cst_17 = arith.constant dense<0xFF800000> : vector<8xf32>
    %43 = vector.multi_reduction <maximumf>, %42, %cst_17 [1] : vector<8x8xf32> to vector<8xf32>
    %44 = vector.shape_cast %43 : vector<8xf32> to vector<8x1xf32>
    %45 = vector.broadcast %44 : vector<8x1xf32> to vector<8x8xf32>
    %46 = arith.subf %42, %45 : vector<8x8xf32>
    %47 = math.exp %46 : vector<8x8xf32>
    %cst_18 = arith.constant dense<0.000000e+00> : vector<8xf32>
    %48 = vector.multi_reduction <add>, %47, %cst_18 [1] : vector<8x8xf32> to vector<8xf32>
    %49 = vector.shape_cast %48 : vector<8xf32> to vector<8x1xf32>
    %50 = tpu.reciprocal %49 {approx = true} : vector<8x1xf32> -> vector<8x1xf32>
    %51 = arith.truncf %47 : vector<8x8xf32> to vector<8x8xbf16>
    %cst_19 = arith.constant dense<0.000000e+00> : vector<8x8xf32>
    %52 = tpu.matmul %51, %39, %cst_19 {dimension_numbers = #tpu.dot_dimension_numbers<[1], [0], [0], [1], [0, 0, 1, 1], [], []>} : vector<8x8xbf16>, vector<8x8xbf16>, vector<8x8xf32> -> vector<8x8xf32>
    %53 = vector.broadcast %50 : vector<8x1xf32> to vector<8x8xf32>
    %54 = arith.mulf %52, %53 : vector<8x8xf32>
    %c0_20 = arith.constant 0 : index
    %c0_21 = arith.constant 0 : index
    %c8 = arith.constant 8 : index
    %55 = vector.load %arg5[%c0_20, %c0_21, %c8] : memref<1x8x32xf32, #tpu.memory_space<vmem>>, vector<1x8x8xf32>
    %56 = vector.shape_cast %55 : vector<1x8x8xf32> to vector<8x8xf32>
    %57 = vector.shape_cast %54 : vector<8x8xf32> to vector<1x8x8xf32>
    tpu.vector_store %arg5[%c0_20, %c0_21, %c8], %57 {strides = array<i32>} : memref<1x8x32xf32, #tpu.memory_space<vmem>>, vector<1x8x8xf32>,
    %58 = vector.extract_strided_slice %9 {offsets = [0, 16], sizes = [8, 8], strides = [1, 1]} : vector<8x32xbf16> to vector<8x8xbf16>
    %59 = vector.extract_strided_slice %11 {offsets = [0, 16], sizes = [8, 8], strides = [1, 1]} : vector<8x32xbf16> to vector<8x8xbf16>
    %60 = vector.extract_strided_slice %13 {offsets = [0, 16], sizes = [8, 8], strides = [1, 1]} : vector<8x32xbf16> to vector<8x8xbf16>
    %cst_22 = arith.constant dense<0.000000e+00> : vector<8x8xf32>
    %61 = tpu.matmul %58, %59, %cst_22 {dimension_numbers = #tpu.dot_dimension_numbers<[1], [1], [0], [0], [0, 0, 1, 0], [], []>} : vector<8x8xbf16>, vector<8x8xbf16>, vector<8x8xf32> -> vector<8x8xf32>
    %62 = vector.broadcast %15 : vector<1x8xf32> to vector<8x8xf32>
    %63 = arith.addf %61, %62 : vector<8x8xf32>
    %cst_23 = arith.constant dense<0xFF800000> : vector<8xf32>
    %64 = vector.multi_reduction <maximumf>, %63, %cst_23 [1] : vector<8x8xf32> to vector<8xf32>
    %65 = vector.shape_cast %64 : vector<8xf32> to vector<8x1xf32>
    %66 = vector.broadcast %65 : vector<8x1xf32> to vector<8x8xf32>
    %67 = arith.subf %63, %66 : vector<8x8xf32>
    %68 = math.exp %67 : vector<8x8xf32>
    %cst_24 = arith.constant dense<0.000000e+00> : vector<8xf32>
    %69 = vector.multi_reduction <add>, %68, %cst_24 [1] : vector<8x8xf32> to vector<8xf32>
    %70 = vector.shape_cast %69 : vector<8xf32> to vector<8x1xf32>
    %71 = tpu.reciprocal %70 {approx = true} : vector<8x1xf32> -> vector<8x1xf32>
    %72 = arith.truncf %68 : vector<8x8xf32> to vector<8x8xbf16>
    %cst_25 = arith.constant dense<0.000000e+00> : vector<8x8xf32>
    %73 = tpu.matmul %72, %60, %cst_25 {dimension_numbers = #tpu.dot_dimension_numbers<[1], [0], [0], [1], [0, 0, 1, 1], [], []>} : vector<8x8xbf16>, vector<8x8xbf16>, vector<8x8xf32> -> vector<8x8xf32>
    %74 = vector.broadcast %71 : vector<8x1xf32> to vector<8x8xf32>
    %75 = arith.mulf %73, %74 : vector<8x8xf32>
    %c0_26 = arith.constant 0 : index
    %c0_27 = arith.constant 0 : index
    %c16 = arith.constant 16 : index
    %76 = vector.load %arg5[%c0_26, %c0_27, %c16] : memref<1x8x32xf32, #tpu.memory_space<vmem>>, vector<1x8x8xf32>
    %77 = vector.shape_cast %76 : vector<1x8x8xf32> to vector<8x8xf32>
    %78 = vector.shape_cast %75 : vector<8x8xf32> to vector<1x8x8xf32>
    tpu.vector_store %arg5[%c0_26, %c0_27, %c16], %78 {strides = array<i32>} : memref<1x8x32xf32, #tpu.memory_space<vmem>>, vector<1x8x8xf32>,
    %79 = vector.extract_strided_slice %9 {offsets = [0, 24], sizes = [8, 8], strides = [1, 1]} : vector<8x32xbf16> to vector<8x8xbf16>
    %80 = vector.extract_strided_slice %11 {offsets = [0, 24], sizes = [8, 8], strides = [1, 1]} : vector<8x32xbf16> to vector<8x8xbf16>
    %81 = vector.extract_strided_slice %13 {offsets = [0, 24], sizes = [8, 8], strides = [1, 1]} : vector<8x32xbf16> to vector<8x8xbf16>
    %cst_28 = arith.constant dense<0.000000e+00> : vector<8x8xf32>
    %82 = tpu.matmul %79, %80, %cst_28 {dimension_numbers = #tpu.dot_dimension_numbers<[1], [1], [0], [0], [0, 0, 1, 0], [], []>} : vector<8x8xbf16>, vector<8x8xbf16>, vector<8x8xf32> -> vector<8x8xf32>
    %83 = vector.broadcast %15 : vector<1x8xf32> to vector<8x8xf32>
    %84 = arith.addf %82, %83 : vector<8x8xf32>
    %cst_29 = arith.constant dense<0xFF800000> : vector<8xf32>
    %85 = vector.multi_reduction <maximumf>, %84, %cst_29 [1] : vector<8x8xf32> to vector<8xf32>
    %86 = vector.shape_cast %85 : vector<8xf32> to vector<8x1xf32>
    %87 = vector.broadcast %86 : vector<8x1xf32> to vector<8x8xf32>
    %88 = arith.subf %84, %87 : vector<8x8xf32>
    %89 = math.exp %88 : vector<8x8xf32>
    %cst_30 = arith.constant dense<0.000000e+00> : vector<8xf32>
    %90 = vector.multi_reduction <add>, %89, %cst_30 [1] : vector<8x8xf32> to vector<8xf32>
    %91 = vector.shape_cast %90 : vector<8xf32> to vector<8x1xf32>
    %92 = tpu.reciprocal %91 {approx = true} : vector<8x1xf32> -> vector<8x1xf32>
    %93 = arith.truncf %89 : vector<8x8xf32> to vector<8x8xbf16>
    %cst_31 = arith.constant dense<0.000000e+00> : vector<8x8xf32>
    %94 = tpu.matmul %93, %81, %cst_31 {dimension_numbers = #tpu.dot_dimension_numbers<[1], [0], [0], [1], [0, 0, 1, 1], [], []>} : vector<8x8xbf16>, vector<8x8xbf16>, vector<8x8xf32> -> vector<8x8xf32>
    %95 = vector.broadcast %92 : vector<8x1xf32> to vector<8x8xf32>
    %96 = arith.mulf %94, %95 : vector<8x8xf32>
    %c0_32 = arith.constant 0 : index
    %c0_33 = arith.constant 0 : index
    %c24 = arith.constant 24 : index
    %97 = vector.load %arg5[%c0_32, %c0_33, %c24] : memref<1x8x32xf32, #tpu.memory_space<vmem>>, vector<1x8x8xf32>
    %98 = vector.shape_cast %97 : vector<1x8x8xf32> to vector<8x8xf32>
    %99 = vector.shape_cast %96 : vector<8x8xf32> to vector<1x8x8xf32>
    tpu.vector_store %arg5[%c0_32, %c0_33, %c24], %99 {strides = array<i32>} : memref<1x8x32xf32, #tpu.memory_space<vmem>>, vector<1x8x8xf32>,
    return
  }
  func.func @transform_0(%arg0: i32) -> (i32, i32, i32) {
    %c0_i32 = arith.constant 0 : i32
    %c0_i32_0 = arith.constant 0 : i32
    %c0_i32_1 = arith.constant 0 : i32
    return %arg0, %c0_i32, %c0_i32_0 : i32, i32, i32
  }
  func.func @transform_1(%arg0: i32) -> (i32, i32, i32) {
    %c0_i32 = arith.constant 0 : i32
    %c0_i32_0 = arith.constant 0 : i32
    %c0_i32_1 = arith.constant 0 : i32
    return %arg0, %c0_i32, %c0_i32_0 : i32, i32, i32
  }
  func.func @transform_2(%arg0: i32) -> (i32, i32) {
    %c0_i32 = arith.constant 0 : i32
    %c0_i32_0 = arith.constant 0 : i32
    %c0_i32_1 = arith.constant 0 : i32
    return %c0_i32, %c0_i32_0 : i32, i32
  }
  func.func @transform_3(%arg0: i32) -> (i32, i32) {
    %c0_i32 = arith.constant 0 : i32
    %c0_i32_0 = arith.constant 0 : i32
    %c0_i32_1 = arith.constant 0 : i32
    return %c0_i32, %c0_i32_0 : i32, i32
  }
  func.func @transform_4(%arg0: i32) -> (i32, i32, i32) {
    %c0_i32 = arith.constant 0 : i32
    %c0_i32_0 = arith.constant 0 : i32
    %c0_i32_1 = arith.constant 0 : i32
    return %arg0, %c0_i32, %c0_i32_0 : i32, i32, i32
  }
}

module attributes {stable_mosaic.version = 11 : i64} {
  func.func @bert_self_attention_kernel(%arg0: i32, %arg1: memref<1x8x32xf32, #tpu.memory_space<vmem>>, %arg2: memref<1x1x8xf32, #tpu.memory_space<vmem>>, %arg3: memref<32x96xbf16, #tpu.memory_space<vmem>>, %arg4: memref<1x96xf32, #tpu.memory_space<vmem>>, %arg5: memref<1x8x32xf32, #tpu.memory_space<vmem>>) attributes {dimension_semantics = [#tpu.dimension_semantics<parallel>], iteration_bounds = array<i64: 2>, scalar_prefetch = 0 : i64, scratch_operands = 0 : i64, tpu.core_type = #tpu.core_type<tc>, window_params = [{transform_indices = @transform_0, window_bounds = array<i64: 1, 8, 32>}, {transform_indices = @transform_1, window_bounds = array<i64: 1, 1, 8>}, {pipeline_mode = #tpu.pipeline_mode<synchronous>, transform_indices = @transform_2, window_bounds = array<i64: 32, 96>}, {pipeline_mode = #tpu.pipeline_mode<synchronous>, transform_indices = @transform_3, window_bounds = array<i64: 1, 96>}, {transform_indices = @transform_4, window_bounds = array<i64: 1, 8, 32>}]} {
    %c0 = arith.constant 0 : index
    %c0_0 = arith.constant 0 : index
    %c0_1 = arith.constant 0 : index
    %0 = vector.load %arg1[%c0, %c0_0, %c0_1] : memref<1x8x32xf32, #tpu.memory_space<vmem>>, vector<1x8x32xf32>
    %1 = vector.shape_cast %0 : vector<1x8x32xf32> to vector<8x32xf32>
    %2 = arith.truncf %1 : vector<8x32xf32> to vector<8x32xbf16>
    %c0_2 = arith.constant 0 : index
    %c0_3 = arith.constant 0 : index
    %3 = vector.load %arg3[%c0_2, %c0_3] : memref<32x96xbf16, #tpu.memory_space<vmem>>, vector<32x96xbf16>
    %cst = arith.constant dense<0.000000e+00> : vector<8x96xf32>
    %4 = tpu.matmul %2, %3, %cst {dimension_numbers = #tpu.dot_dimension_numbers<[1], [0], [0], [1], [0, 0, 1, 1], [], []>} : vector<8x32xbf16>, vector<32x96xbf16>, vector<8x96xf32> -> vector<8x96xf32>
    %c0_4 = arith.constant 0 : index
    %c0_5 = arith.constant 0 : index
    %5 = vector.load %arg4[%c0_4, %c0_5] : memref<1x96xf32, #tpu.memory_space<vmem>>, vector<1x96xf32>
    %6 = vector.broadcast %5 : vector<1x96xf32> to vector<8x96xf32>
    %7 = arith.addf %4, %6 : vector<8x96xf32>
    %8 = vector.extract_strided_slice %7 {offsets = [0, 0], sizes = [8, 32], strides = [1, 1]} : vector<8x96xf32> to vector<8x32xf32>
    %9 = arith.truncf %8 : vector<8x32xf32> to vector<8x32xbf16>
    %10 = vector.extract_strided_slice %7 {offsets = [0, 32], sizes = [8, 32], strides = [1, 1]} : vector<8x96xf32> to vector<8x32xf32>
    %11 = arith.truncf %10 : vector<8x32xf32> to vector<8x32xbf16>
    %12 = vector.extract_strided_slice %7 {offsets = [0, 64], sizes = [8, 32], strides = [1, 1]} : vector<8x96xf32> to vector<8x32xf32>
    %13 = arith.truncf %12 : vector<8x32xf32> to vector<8x32xbf16>
    %c0_6 = arith.constant 0 : index
    %c0_7 = arith.constant 0 : index
    %c0_8 = arith.constant 0 : index
    %14 = vector.load %arg2[%c0_6, %c0_7, %c0_8] : memref<1x1x8xf32, #tpu.memory_space<vmem>>, vector<1x1x8xf32>
    %15 = vector.shape_cast %14 : vector<1x1x8xf32> to vector<1x8xf32>
    %16 = vector.extract_strided_slice %9 {offsets = [0, 0], sizes = [8, 8], strides = [1, 1]} : vector<8x32xbf16> to vector<8x8xbf16>
    %17 = vector.extract_strided_slice %11 {offsets = [0, 0], sizes = [8, 8], strides = [1, 1]} : vector<8x32xbf16> to vector<8x8xbf16>
    %18 = vector.extract_strided_slice %13 {offsets = [0, 0], sizes = [8, 8], strides = [1, 1]} : vector<8x32xbf16> to vector<8x8xbf16>
    %cst_9 = arith.constant dense<0.000000e+00> : vector<8x8xf32>
    %19 = tpu.matmul %16, %17, %cst_9 {dimension_numbers = #tpu.dot_dimension_numbers<[1], [1], [0], [0], [0, 0, 1, 0], [], []>} : vector<8x8xbf16>, vector<8x8xbf16>, vector<8x8xf32> -> vector<8x8xf32>
    %20 = vector.broadcast %15 : vector<1x8xf32> to vector<8x8xf32>
    %21 = arith.addf %19, %20 : vector<8x8xf32>
    %cst_10 = arith.constant dense<0xFF800000> : vector<8xf32>
    %22 = vector.multi_reduction <maximumf>, %21, %cst_10 [1] : vector<8x8xf32> to vector<8xf32>
    %23 = vector.shape_cast %22 : vector<8xf32> to vector<8x1xf32>
    %24 = vector.broadcast %23 : vector<8x1xf32> to vector<8x8xf32>
    %25 = arith.subf %21, %24 : vector<8x8xf32>
    %26 = math.exp %25 : vector<8x8xf32>
    %cst_11 = arith.constant dense<0.000000e+00> : vector<8xf32>
    %27 = vector.multi_reduction <add>, %26, %cst_11 [1] : vector<8x8xf32> to vector<8xf32>
    %28 = vector.shape_cast %27 : vector<8xf32> to vector<8x1xf32>
    %29 = tpu.reciprocal %28 {approx = true} : vector<8x1xf32> -> vector<8x1xf32>
    %30 = arith.truncf %26 : vector<8x8xf32> to vector<8x8xbf16>
    %cst_12 = arith.constant dense<0.000000e+00> : vector<8x8xf32>
    %31 = tpu.matmul %30, %18, %cst_12 {dimension_numbers = #tpu.dot_dimension_numbers<[1], [0], [0], [1], [0, 0, 1, 1], [], []>} : vector<8x8xbf16>, vector<8x8xbf16>, vector<8x8xf32> -> vector<8x8xf32>
    %32 = vector.broadcast %29 : vector<8x1xf32> to vector<8x8xf32>
    %33 = arith.mulf %31, %32 : vector<8x8xf32>
    %c0_13 = arith.constant 0 : index
    %c0_14 = arith.constant 0 : index
    %c0_15 = arith.constant 0 : index
    %34 = vector.load %arg5[%c0_13, %c0_14, %c0_15] : memref<1x8x32xf32, #tpu.memory_space<vmem>>, vector<1x8x8xf32>
    %35 = vector.shape_cast %34 : vector<1x8x8xf32> to vector<8x8xf32>
    %36 = vector.shape_cast %33 : vector<8x8xf32> to vector<1x8x8xf32>
    tpu.vector_store %arg5[%c0_13, %c0_14, %c0_15], %36 {strides = array<i32>} : memref<1x8x32xf32, #tpu.memory_space<vmem>>, vector<1x8x8xf32>,
    %37 = vector.extract_strided_slice %9 {offsets = [0, 8], sizes = [8, 8], strides = [1, 1]} : vector<8x32xbf16> to vector<8x8xbf16>
    %38 = vector.extract_strided_slice %11 {offsets = [0, 8], sizes = [8, 8], strides = [1, 1]} : vector<8x32xbf16> to vector<8x8xbf16>
    %39 = vector.extract_strided_slice %13 {offsets = [0, 8], sizes = [8, 8], strides = [1, 1]} : vector<8x32xbf16> to vector<8x8xbf16>
    %cst_16 = arith.constant dense<0.000000e+00> : vector<8x8xf32>
    %40 = tpu.matmul %37, %38, %cst_16 {dimension_numbers = #tpu.dot_dimension_numbers<[1], [1], [0], [0], [0, 0, 1, 0], [], []>} : vector<8x8xbf16>, vector<8x8xbf16>, vector<8x8xf32> -> vector<8x8xf32>
    %41 = vector.broadcast %15 : vector<1x8xf32> to vector<8x8xf32>
    %42 = arith.addf %40, %41 : vector<8x8xf32>
    %cst_17 = arith.constant dense<0xFF800000> : vector<8xf32>
    %43 = vector.multi_reduction <maximumf>, %42, %cst_17 [1] : vector<8x8xf32> to vector<8xf32>
    %44 = vector.shape_cast %43 : vector<8xf32> to vector<8x1xf32>
    %45 = vector.broadcast %44 : vector<8x1xf32> to vector<8x8xf32>
    %46 = arith.subf %42, %45 : vector<8x8xf32>
    %47 = math.exp %46 : vector<8x8xf32>
    %cst_18 = arith.constant dense<0.000000e+00> : vector<8xf32>
    %48 = vector.multi_reduction <add>, %47, %cst_18 [1] : vector<8x8xf32> to vector<8xf32>
    %49 = vector.shape_cast %48 : vector<8xf32> to vector<8x1xf32>
    %50 = tpu.reciprocal %49 {approx = true} : vector<8x1xf32> -> vector<8x1xf32>
    %51 = arith.truncf %47 : vector<8x8xf32> to vector<8x8xbf16>
    %cst_19 = arith.constant dense<0.000000e+00> : vector<8x8xf32>
    %52 = tpu.matmul %51, %39, %cst_19 {dimension_numbers = #tpu.dot_dimension_numbers<[1], [0], [0], [1], [0, 0, 1, 1], [], []>} : vector<8x8xbf16>, vector<8x8xbf16>, vector<8x8xf32> -> vector<8x8xf32>
    %53 = vector.broadcast %50 : vector<8x1xf32> to vector<8x8xf32>
    %54 = arith.mulf %52, %53 : vector<8x8xf32>
    %c0_20 = arith.constant 0 : index
    %c0_21 = arith.constant 0 : index
    %c8 = arith.constant 8 : index
    %55 = vector.load %arg5[%c0_20, %c0_21, %c8] : memref<1x8x32xf32, #tpu.memory_space<vmem>>, vector<1x8x8xf32>
    %56 = vector.shape_cast %55 : vector<1x8x8xf32> to vector<8x8xf32>
    %57 = vector.shape_cast %54 : vector<8x8xf32> to vector<1x8x8xf32>
    tpu.vector_store %arg5[%c0_20, %c0_21, %c8], %57 {strides = array<i32>} : memref<1x8x32xf32, #tpu.memory_space<vmem>>, vector<1x8x8xf32>,
    %58 = vector.extract_strided_slice %9 {offsets = [0, 16], sizes = [8, 8], strides = [1, 1]} : vector<8x32xbf16> to vector<8x8xbf16>
    %59 = vector.extract_strided_slice %11 {offsets = [0, 16], sizes = [8, 8], strides = [1, 1]} : vector<8x32xbf16> to vector<8x8xbf16>
    %60 = vector.extract_strided_slice %13 {offsets = [0, 16], sizes = [8, 8], strides = [1, 1]} : vector<8x32xbf16> to vector<8x8xbf16>
    %cst_22 = arith.constant dense<0.000000e+00> : vector<8x8xf32>
    %61 = tpu.matmul %58, %59, %cst_22 {dimension_numbers = #tpu.dot_dimension_numbers<[1], [1], [0], [0], [0, 0, 1, 0], [], []>} : vector<8x8xbf16>, vector<8x8xbf16>, vector<8x8xf32> -> vector<8x8xf32>
    %62 = vector.broadcast %15 : vector<1x8xf32> to vector<8x8xf32>
    %63 = arith.addf %61, %62 : vector<8x8xf32>
    %cst_23 = arith.constant dense<0xFF800000> : vector<8xf32>
    %64 = vector.multi_reduction <maximumf>, %63, %cst_23 [1] : vector<8x8xf32> to vector<8xf32>
    %65 = vector.shape_cast %64 : vector<8xf32> to vector<8x1xf32>
    %66 = vector.broadcast %65 : vector<8x1xf32> to vector<8x8xf32>
    %67 = arith.subf %63, %66 : vector<8x8xf32>
    %68 = math.exp %67 : vector<8x8xf32>
    %cst_24 = arith.constant dense<0.000000e+00> : vector<8xf32>
    %69 = vector.multi_reduction <add>, %68, %cst_24 [1] : vector<8x8xf32> to vector<8xf32>
    %70 = vector.shape_cast %69 : vector<8xf32> to vector<8x1xf32>
    %71 = tpu.reciprocal %70 {approx = true} : vector<8x1xf32> -> vector<8x1xf32>
    %72 = arith.truncf %68 : vector<8x8xf32> to vector<8x8xbf16>
    %cst_25 = arith.constant dense<0.000000e+00> : vector<8x8xf32>
    %73 = tpu.matmul %72, %60, %cst_25 {dimension_numbers = #tpu.dot_dimension_numbers<[1], [0], [0], [1], [0, 0, 1, 1], [], []>} : vector<8x8xbf16>, vector<8x8xbf16>, vector<8x8xf32> -> vector<8x8xf32>
    %74 = vector.broadcast %71 : vector<8x1xf32> to vector<8x8xf32>
    %75 = arith.mulf %73, %74 : vector<8x8xf32>
    %c0_26 = arith.constant 0 : index
    %c0_27 = arith.constant 0 : index
    %c16 = arith.constant 16 : index
    %76 = vector.load %arg5[%c0_26, %c0_27, %c16] : memref<1x8x32xf32, #tpu.memory_space<vmem>>, vector<1x8x8xf32>
    %77 = vector.shape_cast %76 : vector<1x8x8xf32> to vector<8x8xf32>
    %78 = vector.shape_cast %75 : vector<8x8xf32> to vector<1x8x8xf32>
    tpu.vector_store %arg5[%c0_26, %c0_27, %c16], %78 {strides = array<i32>} : memref<1x8x32xf32, #tpu.memory_space<vmem>>, vector<1x8x8xf32>,
    %79 = vector.extract_strided_slice %9 {offsets = [0, 24], sizes = [8, 8], strides = [1, 1]} : vector<8x32xbf16> to vector<8x8xbf16>
    %80 = vector.extract_strided_slice %11 {offsets = [0, 24], sizes = [8, 8], strides = [1, 1]} : vector<8x32xbf16> to vector<8x8xbf16>
    %81 = vector.extract_strided_slice %13 {offsets = [0, 24], sizes = [8, 8], strides = [1, 1]} : vector<8x32xbf16> to vector<8x8xbf16>
    %cst_28 = arith.constant dense<0.000000e+00> : vector<8x8xf32>
    %82 = tpu.matmul %79, %80, %cst_28 {dimension_numbers = #tpu.dot_dimension_numbers<[1], [1], [0], [0], [0, 0, 1, 0], [], []>} : vector<8x8xbf16>, vector<8x8xbf16>, vector<8x8xf32> -> vector<8x8xf32>
    %83 = vector.broadcast %15 : vector<1x8xf32> to vector<8x8xf32>
    %84 = arith.addf %82, %83 : vector<8x8xf32>
    %cst_29 = arith.constant dense<0xFF800000> : vector<8xf32>
    %85 = vector.multi_reduction <maximumf>, %84, %cst_29 [1] : vector<8x8xf32> to vector<8xf32>
    %86 = vector.shape_cast %85 : vector<8xf32> to vector<8x1xf32>
    %87 = vector.broadcast %86 : vector<8x1xf32> to vector<8x8xf32>
    %88 = arith.subf %84, %87 : vector<8x8xf32>
    %89 = math.exp %88 : vector<8x8xf32>
    %cst_30 = arith.constant dense<0.000000e+00> : vector<8xf32>
    %90 = vector.multi_reduction <add>, %89, %cst_30 [1] : vector<8x8xf32> to vector<8xf32>
    %91 = vector.shape_cast %90 : vector<8xf32> to vector<8x1xf32>
    %92 = tpu.reciprocal %91 {approx = true} : vector<8x1xf32> -> vector<8x1xf32>
    %93 = arith.truncf %89 : vector<8x8xf32> to vector<8x8xbf16>
    %cst_31 = arith.constant dense<0.000000e+00> : vector<8x8xf32>
    %94 = tpu.matmul %93, %81, %cst_31 {dimension_numbers = #tpu.dot_dimension_numbers<[1], [0], [0], [1], [0, 0, 1, 1], [], []>} : vector<8x8xbf16>, vector<8x8xbf16>, vector<8x8xf32> -> vector<8x8xf32>
    %95 = vector.broadcast %92 : vector<8x1xf32> to vector<8x8xf32>
    %96 = arith.mulf %94, %95 : vector<8x8xf32>
    %c0_32 = arith.constant 0 : index
    %c0_33 = arith.constant 0 : index
    %c24 = arith.constant 24 : index
    %97 = vector.load %arg5[%c0_32, %c0_33, %c24] : memref<1x8x32xf32, #tpu.memory_space<vmem>>, vector<1x8x8xf32>
    %98 = vector.shape_cast %97 : vector<1x8x8xf32> to vector<8x8xf32>
    %99 = vector.shape_cast %96 : vector<8x8xf32> to vector<1x8x8xf32>
    tpu.vector_store %arg5[%c0_32, %c0_33, %c24], %99 {strides = array<i32>} : memref<1x8x32xf32, #tpu.memory_space<vmem>>, vector<1x8x8xf32>,
    return
  }
  func.func @transform_0(%arg0: i32) -> (i32, i32, i32) {
    %c0_i32 = arith.constant 0 : i32
    %c0_i32_0 = arith.constant 0 : i32
    %c0_i32_1 = arith.constant 0 : i32
    return %arg0, %c0_i32, %c0_i32_0 : i32, i32, i32
  }
  func.func @transform_1(%arg0: i32) -> (i32, i32, i32) {
    %c0_i32 = arith.constant 0 : i32
    %c0_i32_0 = arith.constant 0 : i32
    %c0_i32_1 = arith.constant 0 : i32
    return %arg0, %c0_i32, %c0_i32_0 : i32, i32, i32
  }
  func.func @transform_2(%arg0: i32) -> (i32, i32) {
    %c0_i32 = arith.constant 0 : i32
    %c0_i32_0 = arith.constant 0 : i32
    %c0_i32_1 = arith.constant 0 : i32
    return %c0_i32, %c0_i32_0 : i32, i32
  }
  func.func @transform_3(%arg0: i32) -> (i32, i32) {
    %c0_i32 = arith.constant 0 : i32
    %c0_i32_0 = arith.constant 0 : i32
    %c0_i32_1 = arith.constant 0 : i32
    return %c0_i32, %c0_i32_0 : i32, i32
  }
  func.func @transform_4(%arg0: i32) -> (i32, i32, i32) {
    %c0_i32 = arith.constant 0 : i32
    %c0_i32_0 = arith.constant 0 : i32
    %c0_i32_1 = arith.constant 0 : i32
    return %arg0, %c0_i32, %c0_i32_0 : i32, i32, i32
  }
}

</mosaic_0001>

<llo_original>
// kernel: tpu_custom_call.1
$region0: #{tpu_custom_call.1}
  #allocation0 [shape = 'u32[]', space=smem, size = 0x4, offset = 0x4, fixed_abs, tag = 'smem constant byte address 0x4 - core index']
  #allocation1 [shape = 'u32[144,128]{1,0:T(1,128)}', space=vmem, size = 0x12000, scoped, tag = 'internal scratch']
  %s0 = inlined_call_operand.hbm [shape: f32[2,8,32], index: 0, kind: input, shape index: {}]
  %s1 = inlined_call_operand.hbm [shape: f32[2,1,8], index: 1, kind: input, shape index: {}]
  %s2 = inlined_call_operand.hbm [shape: bf16[32,96], index: 2, kind: input, shape index: {}]
  %s3 = inlined_call_operand.vmem [shape: f32[1,96], index: 3, kind: input, shape index: {}]
  %s4 = inlined_call_operand.hbm [shape: f32[2,8,32], index: 4, kind: output, shape index: {}]
  %s5 = sld [smem:[#allocation0]]
  $region61: #{tpu_custom_call.1} parent=0
    _
  %s7 = ssub.s32 1, %s5
  %s8 = scalar_select 0, %s7, %s5
  $region1: #{tpu_custom_call.1} parent=0
    #allocation2 [shape = 'u8[8192]{0}', space=vmem, size = 0x2000, scoped, tag = 'input window, operand 0']
    #allocation3 [shape = 's32[2]{0}', space=sflag, size = 0x8, scoped, tag = 'scoped memory for tpu_custom_call.1']
    #allocation4 [shape = 's32[2]{0}', space=sflag, size = 0x8, scoped, tag = 'scoped memory for tpu_custom_call.1']
    #allocation5 [shape = 'u8[1024]{0}', space=vmem, size = 0x400, scoped, tag = 'input window, operand 1']
    #allocation6 [shape = 's32[2]{0}', space=sflag, size = 0x8, scoped, tag = 'scoped memory for tpu_custom_call.1']
    #allocation7 [shape = 'u8[8192]{0}', space=vmem, size = 0x2000, scoped, tag = 'input window, operand 2, single buffered']
    #allocation8 [shape = 'u8[8192]{0}', space=vmem, size = 0x2000, scoped, tag = 'output window, operand 0']
    %9 = vsyncpa [#allocation3], 0
    %s10 = scalar_lea.sflag [#allocation3], 1
    %11 = vsyncpa %s10, 0
    %12 = vsyncpa [#allocation6], 0
    %s13 = scalar_lea.sflag [#allocation6], 1
    %14 = vsyncpa %s13, 0
    %15 = vsyncpa [#allocation4], 0
    %s16 = scalar_lea.sflag [#allocation4], 1
    %17 = vsyncpa %s16, 0
    loop: start=0, step=1, limit=4
    $region2: #{tpu_custom_call.1} parent=1 // loop_pre_header
      _
    $region3: #{tpu_custom_call.1} parent=1 // loop_header
      %s19 = sphi 0, %s23
      %p20 = scmp.ge.s32.totalorder %s19, 4
      %s29 = sphi 0, %s31
      %s32 = sphi 0, %s29
      %s33 = sphi 0, %s32
      %s49 = sphi 0, %s33
      %s55 = sphi 0, %s57
      %s58 = sphi 0, %s55
      %s59 = sphi 0, %s58
      %s75 = sphi 0, %s59
      %s79 = sphi 0, %s79
      %s81 = sphi 0, %s79
      %s82 = sphi 0, %s81
      %s96 = sphi 0, %s82
      %s100 = sphi 0, %s100
      %s102 = sphi 0, %s100
      %s103 = sphi 0, %s102
      %s117 = sphi 0, %s103
      %s123 = sphi 0, %s125
      %s126 = sphi 0, %s123
      %s127 = sphi 0, %s126
      %s143 = sphi 0, %s127
    $region4: #{tpu_custom_call.1} parent=1 // loop_header_branch
      %22 = sbr.rel (%p20) target = $region8
    $region5: #{tpu_custom_call.1} parent=1 // loop_body
      %s24 = ssub.s32 %s19, 1
      %s25 = ssub.s32 %s19, 2
      %s26 = sadd.s32 %s19, 1
      %s27 = ssub.s32 %s19, %s26
      %p28 = scmp.eq.s32.totalorder %s27, 0
      %s30 = sadd.s32 %s29, 1
      %s31 = scalar_select %p28, %s29, %s30
      %p34 = pneg %p28
      %p35 = scmp.eq.s32.totalorder %s19, 1
      %p36 = por %p34, %p35
      %p37 = scmp.ne.s32.totalorder %s29, %s32
      %p38 = scmp.eq.s32.totalorder %s19, 0
      %p39 = por %p37, %p38
      %p40 = scmp.ne.s32.totalorder %s29, %s32
      %p41 = scmp.eq.s32.totalorder %s24, 1
      %p42 = por %p40, %p41
      %p43 = scmp.ne.s32.totalorder %s32, %s33
      %p44 = scmp.eq.s32.totalorder %s24, 0
      %p45 = por %p43, %p44
      %p46 = scmp.ne.s32.totalorder %s32, %s33
      %p47 = scmp.eq.s32.totalorder %s25, 1
      %p48 = por %p46, %p47
      %p50 = scmp.ne.s32.totalorder %s33, %s49
      %p51 = scmp.eq.s32.totalorder %s25, 0
      %p52 = por %p50, %p51
      %s53 = ssub.s32 %s19, %s26
      %p54 = scmp.eq.s32.totalorder %s53, 0
      %s56 = sadd.s32 %s55, 1
      %s57 = scalar_select %p54, %s55, %s56
      %p60 = pneg %p54
      %p61 = scmp.eq.s32.totalorder %s19, 1
      %p62 = por %p60, %p61
      %p63 = scmp.ne.s32.totalorder %s55, %s58
      %p64 = scmp.eq.s32.totalorder %s19, 0
      %p65 = por %p63, %p64
      %p66 = scmp.ne.s32.totalorder %s55, %s58
      %p67 = scmp.eq.s32.totalorder %s24, 1
      %p68 = por %p66, %p67
      %p69 = scmp.ne.s32.totalorder %s58, %s59
      %p70 = scmp.eq.s32.totalorder %s24, 0
      %p71 = por %p69, %p70
      %p72 = scmp.ne.s32.totalorder %s58, %s59
      %p73 = scmp.eq.s32.totalorder %s25, 1
      %p74 = por %p72, %p73
      %p76 = scmp.ne.s32.totalorder %s59, %s75
      %p77 = scmp.eq.s32.totalorder %s25, 0
      %p78 = por %p76, %p77
      %s80 = sadd.s32 %s79, 1
      %p83 = scmp.eq.s32.totalorder %s19, 1
      %p84 = scmp.ne.s32.totalorder %s79, %s81
      %p85 = scmp.eq.s32.totalorder %s19, 0
      %p86 = por %p84, %p85
      %p87 = scmp.ne.s32.totalorder %s79, %s81
      %p88 = scmp.eq.s32.totalorder %s24, 1
      %p89 = por %p87, %p88
      %p90 = scmp.ne.s32.totalorder %s81, %s82
      %p91 = scmp.eq.s32.totalorder %s24, 0
      %p92 = por %p90, %p91
      %p93 = scmp.ne.s32.totalorder %s81, %s82
      %p94 = scmp.eq.s32.totalorder %s25, 1
      %p95 = por %p93, %p94
      %p97 = scmp.ne.s32.totalorder %s82, %s96
      %p98 = scmp.eq.s32.totalorder %s25, 0
      %p99 = por %p97, %p98
      %s101 = sadd.s32 %s100, 1
      %p104 = scmp.eq.s32.totalorder %s19, 1
      %p105 = scmp.ne.s32.totalorder %s100, %s102
      %p106 = scmp.eq.s32.totalorder %s19, 0
      %p107 = por %p105, %p106
      %p108 = scmp.ne.s32.totalorder %s100, %s102
      %p109 = scmp.eq.s32.totalorder %s24, 1
      %p110 = por %p108, %p109
      %p111 = scmp.ne.s32.totalorder %s102, %s103
      %p112 = scmp.eq.s32.totalorder %s24, 0
      %p113 = por %p111, %p112
      %p114 = scmp.ne.s32.totalorder %s102, %s103
      %p115 = scmp.eq.s32.totalorder %s25, 1
      %p116 = por %p114, %p115
      %p118 = scmp.ne.s32.totalorder %s103, %s117
      %p119 = scmp.eq.s32.totalorder %s25, 0
      %p120 = por %p118, %p119
      %s121 = ssub.s32 %s19, %s26
      %p122 = scmp.eq.s32.totalorder %s121, 0
      %s124 = sadd.s32 %s123, 1
      %s125 = scalar_select %p122, %s123, %s124
      %p128 = pneg %p122
      %p129 = scmp.eq.s32.totalorder %s19, 1
      %p130 = por %p128, %p129
      %p131 = scmp.ne.s32.totalorder %s123, %s126
      %p132 = scmp.eq.s32.totalorder %s19, 0
      %p133 = por %p131, %p132
      %p134 = scmp.ne.s32.totalorder %s123, %s126
      %p135 = scmp.eq.s32.totalorder %s24, 1
      %p136 = por %p134, %p135
      %p137 = scmp.ne.s32.totalorder %s126, %s127
      %p138 = scmp.eq.s32.totalorder %s24, 0
      %p139 = por %p137, %p138
      %p140 = scmp.ne.s32.totalorder %s126, %s127
      %p141 = scmp.eq.s32.totalorder %s25, 1
      %p142 = por %p140, %p141
      %p144 = scmp.ne.s32.totalorder %s127, %s143
      %p145 = scmp.eq.s32.totalorder %s25, 0
      %p146 = por %p144, %p145
      %p147 = scmp.le.s32.totalorder 1, %s19
      %p148 = scmp.lt.s32.totalorder %s19, 3
      %p149 = pnand %p147, %p148
      %p150 = pneg %p149
      // Predicated region
      $region9: #{tpu_custom_call.1} parent=5 // pred_check
        _
      $region10: #{tpu_custom_call.1} parent=5 // pred_check_branch
        %152 = sbr.rel (%p149) target = $region12
      $region11: #{tpu_custom_call.1} parent=5 // pred_region
        %s153 = ssub.s32 %s19, 1
        // Predicated region
        $region13: #{tpu_custom_call.1} parent=11 // pred_check
          %p154 = pneg %p92
        $region14: #{tpu_custom_call.1} parent=11 // pred_check_branch
          %156 = sbr.rel (%p154) target = $region16
        $region15: #{tpu_custom_call.1} parent=11 // pred_region
          %s158 = ssub.s32 256, 256
          %159 = vsyncadd [#allocation6], %s158
          %s160 = sshll.u32 [#allocation7], 4
          %s161 = int_to_ptr.vmem [resolvable:$true] %s160
          %166 = dma.hbm_to_vmem [thread:$0]  %s2, 256, %s161, [#allocation6], 64, 64, 4
        $region16: #{tpu_custom_call.1} parent=11 // pred_fallthru
          _
        // Predicated region
        $region17: #{tpu_custom_call.1} parent=11 // pred_check
          %p167 = pneg %p113
        $region18: #{tpu_custom_call.1} parent=11 // pred_check_branch
          %169 = sbr.rel (%p167) target = $region20
        $region19: #{tpu_custom_call.1} parent=11 // pred_region
          _
        $region20: #{tpu_custom_call.1} parent=11 // pred_fallthru
          _
      $region12: #{tpu_custom_call.1} parent=5 // pred_fallthru
        _
      %p170 = scmp.lt.s32.totalorder %s19, 2
      // Predicated region
      $region21: #{tpu_custom_call.1} parent=5 // pred_check
        %p171 = pneg %p170
      $region22: #{tpu_custom_call.1} parent=5 // pred_check_branch
        %173 = sbr.rel (%p171) target = $region24
      $region23: #{tpu_custom_call.1} parent=5 // pred_region
        // Predicated region
        $region25: #{tpu_custom_call.1} parent=23 // pred_check
          %p174 = pneg %p39
        $region26: #{tpu_custom_call.1} parent=23 // pred_check_branch
          %176 = sbr.rel (%p174) target = $region28
        $region27: #{tpu_custom_call.1} parent=23 // pred_region
          %s177 = sand.u32 %s29, 1
          %s178 = scalar_lea.sflag [#allocation3], %s177
          %s179 = sand.u32 %s29, 1
          %s180 = smul.addr %s179, 8
          %s181 = scalar_lea.vmem [#allocation2], %s180
          %s183 = ssub.s32 128, 128
          %184 = vsyncadd %s178, %s183
          %s185 = smul.addr %s19, 128
          %s186 = scalar_lea.hbm %s0, %s185
          %s188 = sshll.u32 %s181, 4
          %s189 = int_to_ptr.vmem [resolvable:$true] %s188
          %191 = dma.hbm_to_vmem [thread:$0]  %s186, 128, %s189, %s178
        $region28: #{tpu_custom_call.1} parent=23 // pred_fallthru
          _
        // Predicated region
        $region29: #{tpu_custom_call.1} parent=23 // pred_check
          %p192 = pneg %p65
        $region30: #{tpu_custom_call.1} parent=23 // pred_check_branch
          %194 = sbr.rel (%p192) target = $region32
        $region31: #{tpu_custom_call.1} parent=23 // pred_region
          %s195 = sand.u32 %s19, 1
          %s196 = scalar_lea.sflag [#allocation6], %s195
          %s197 = sand.u32 %s55, 1
          %s198 = scalar_lea.vmem [#allocation5], %s197
          %s200 = ssub.s32 16, 16
          %201 = vsyncadd %s196, %s200
          %s202 = smul.addr %s19, 16
          %s203 = scalar_lea.hbm %s1, %s202
          %s205 = sshll.u32 %s198, 4
          %s206 = int_to_ptr.vmem [resolvable:$true] %s205
          %208 = dma.hbm_to_vmem [thread:$0]  %s203, 16, %s206, %s196
        $region32: #{tpu_custom_call.1} parent=23 // pred_fallthru
          _
      $region24: #{tpu_custom_call.1} parent=5 // pred_fallthru
        _
      %p209 = scmp.le.s32.totalorder 1, %s19
      %p210 = scmp.lt.s32.totalorder %s19, 3
      %p211 = pnand %p209, %p210
      %p212 = pneg %p211
      // Predicated region
      $region33: #{tpu_custom_call.1} parent=5 // pred_check
        _
      $region34: #{tpu_custom_call.1} parent=5 // pred_check_branch
        %214 = sbr.rel (%p211) target = $region36
      $region35: #{tpu_custom_call.1} parent=5 // pred_region
        %s215 = ssub.s32 %s19, 1
        %s216 = sand.u32 %s32, 1
        %s217 = scalar_lea.sflag [#allocation3], %s216
        %s218 = sand.u32 %s32, 1
        %s219 = smul.addr %s218, 8
        %s220 = scalar_lea.vmem [#allocation2], %s219
        // Predicated region
        $region37: #{tpu_custom_call.1} parent=35 // pred_check
          %p221 = pneg %p45
        $region38: #{tpu_custom_call.1} parent=35 // pred_check_branch
          %223 = sbr.rel (%p221) target = $region40
        $region39: #{tpu_custom_call.1} parent=35 // pred_region
          %224 = dma.done %s217, 128
        $region40: #{tpu_custom_call.1} parent=35 // pred_fallthru
          _
        %s225 = sand.u32 %s24, 1
        %s226 = scalar_lea.sflag [#allocation6], %s225
        %s227 = sand.u32 %s58, 1
        %s228 = scalar_lea.vmem [#allocation5], %s227
        // Predicated region
        $region41: #{tpu_custom_call.1} parent=35 // pred_check
          %p229 = pneg %p71
        $region42: #{tpu_custom_call.1} parent=35 // pred_check_branch
          %231 = sbr.rel (%p229) target = $region44
        $region43: #{tpu_custom_call.1} parent=35 // pred_region
          %232 = dma.done %s226, 16
        $region44: #{tpu_custom_call.1} parent=35 // pred_fallthru
          _
        // Predicated region
        $region45: #{tpu_custom_call.1} parent=35 // pred_check
          %p233 = pneg %p92
        $region46: #{tpu_custom_call.1} parent=35 // pred_check_branch
          %235 = sbr.rel (%p233) target = $region48
        $region47: #{tpu_custom_call.1} parent=35 // pred_region
          %236 = dma.done [#allocation6], 256
        $region48: #{tpu_custom_call.1} parent=35 // pred_fallthru
          _
        %s237 = sand.u32 %s32, 1
        %s238 = scalar_lea.sflag [#allocation3], %s237
        %s239 = sand.u32 %s32, 1
        %s240 = smul.addr %s239, 8
        %s241 = scalar_lea.vmem [#allocation2], %s240
        %p242 = pneg %p45
        %p243 = pneg %p42
        %s244 = sand.u32 %s24, 1
        %s245 = scalar_lea.sflag [#allocation6], %s244
        %s246 = sand.u32 %s58, 1
        %s247 = scalar_lea.vmem [#allocation5], %s246
        %p248 = pneg %p71
        %p249 = pneg %p68
        %p250 = pneg %p92
        %p251 = pneg %p89
        %p252 = pneg %p113
        %p253 = pneg %p110
        %p254 = pneg %p139
        %p255 = pneg %p136
        %s256 = sand.u32 %s126, 1
        %s257 = scalar_lea.sflag [#allocation4], %s256
        %s258 = sand.u32 %s126, 1
        %s259 = smul.addr %s258, 8
        %s260 = scalar_lea.vmem [#allocation8], %s259
        %v262 = vld [vmem:[%s220] sm:$0xff]
        %v263 = vpack.c.bf16 %v262, %v262
        %v264 = vld [vmem:[#allocation7] sm:$0xf]
        %v265 = vld [vmem:[#allocation7 + $0x4] sm:$0xf]
        %v266 = vld [vmem:[#allocation7 + $0x8] sm:$0xf]
        %v267 = vld [vmem:[#allocation7 + $0xc] sm:$0xf]
        %v268 = vld [vmem:[%s3] sm:$0x1]
        %v270 = vlaneseq
        %v271 = vshrl.u32 %v270, 7
        %v272 = vsub.s32 0, %v271
        %v273 = vrot.slane %v268, %v272
        %v279 = vunpack.c.l.b16 %v264
        %v280 = vunpack.c.l.b16 %v265
        %v281 = vunpack.c.l.b16 %v266
        %v282 = vunpack.c.l.b16 %v267
        %v283 = vpack.c.b16 %v280, %v279
        %v284 = vpack.c.b16 %v282, %v281
        %vm287 = vcmask 261120
        %v289 = vsel %vm287, %v263, 0
        %291 = vmatprep.subr.bf16.mxu0 0
        %292 = vmatpush1.bf16.msra.mxu0 0
        %293 = vmatprep.subr.bf16.mxu0 0
        %294 = vmatpush1.bf16.msra.mxu0 0
        %295 = vmatprep.subr.bf16.mxu0 0
        %296 = vmatpush1.bf16.msra.mxu0 0
        %297 = vmatprep.subr.bf16.mxu0 0
        %298 = vmatpush1.bf16.msra.mxu0 0
        %299 = vmatprep.subr.bf16.mxu0 0
        %300 = vmatpush1.bf16.msra.mxu0 0
        %301 = vmatprep.subr.bf16.mxu0 0
        %302 = vmatpush1.bf16.msra.mxu0 0
        %303 = vmatprep.subr.bf16.mxu0 0
        %304 = vmatpush1.bf16.msra.mxu0 %v284
        %305 = vmatprep.subr.bf16.mxu0 0
        %306 = vmatpush1.bf16.msra.mxu0 %v283
        %307 = vmatprep.subr.bf16.mxu0 0
        %308 = vmatpush2.bf16.msra.mxu0 0
        %309 = vmatprep.subr.bf16.mxu0 0
        %310 = vmatpush2.bf16.msra.mxu0 0
        %311 = vmatprep.subr.bf16.mxu0 0
        %312 = vmatpush2.bf16.msra.mxu0 0
        %313 = vmatprep.subr.bf16.mxu0 0
        %314 = vmatpush2.bf16.msra.mxu0 0
        %315 = vmatprep.subr.bf16.mxu0 0
        %316 = vmatpush2.bf16.msra.mxu0 0
        %317 = vmatprep.subr.bf16.mxu0 0
        %318 = vmatpush2.bf16.msra.mxu0 0
        %319 = vmatprep.subr.bf16.mxu0 0
        %320 = vmatpush2.bf16.msra.mxu0 0
        %321 = vmatprep.subr.bf16.mxu0 0
        %322 = vmatpush2.bf16.msra.mxu0 0
        %323 = vmatprep.mubr.bf16.mxu0 0
        %324 = vmatmul.mubr.bf16.gmra.mxu0 %v289
        %v325 = vpop.f32.mrf.mxu0
        %v326 = vadd.f32 %v273, %v325
        %v327 = vpop.f32.mrf.mxu0
        %v328 = vpop.f32.mrf.mxu0
        %v329 = vpop.f32.mrf.mxu0
        %330 = vdwg.mxu0
        %v331 = vpack.c.bf16 %v326, %v326
        %v332 = vld [vmem:[%s228] sm:$0x1]
        %v334 = vlaneseq
        %v335 = vshrl.u32 %v334, 7
        %v336 = vsub.s32 0, %v335
        %v337 = vrot.slane %v332, %v336
        %340 = vrot.lane.b32.xlu0 %v331, 96
        %v341 = vpop.permute.xlu0 %340
        %vm342 = vcmask 64512
        %v344 = vsel %vm342, %v331, 0
        %v347 = vsel %vm342, %v341, 0
        %349 = vmatprep.subr.bf16.mxu0 0
        %350 = vmatpush1.bf16.xpose.msra.mxu0 0
        %351 = vmatprep.subr.bf16.mxu0 0
        %352 = vmatpush1.bf16.xpose.msra.mxu0 0
        %353 = vmatprep.subr.bf16.mxu0 0
        %354 = vmatpush1.bf16.xpose.msra.mxu0 0
        %355 = vmatprep.subr.bf16.mxu0 0
        %356 = vmatpush1.bf16.xpose.msra.mxu0 0
        %357 = vmatprep.subr.bf16.mxu0 0
        %358 = vmatpush1.bf16.xpose.msra.mxu0 0
        %359 = vmatprep.subr.bf16.mxu0 0
        %360 = vmatpush1.bf16.xpose.msra.mxu0 0
        %361 = vmatprep.subr.bf16.mxu0 0
        %362 = vmatpush1.bf16.xpose.msra.mxu0 0
        %363 = vmatprep.subr.bf16.mxu0 0
        %364 = vmatpush1.bf16.xpose.msra.mxu0 %v347
        %365 = vmatprep.subr.bf16.mxu0 0
        %366 = vmatpush2.bf16.xpose.msra.mxu0 0
        %367 = vmatprep.subr.bf16.mxu0 0
        %368 = vmatpush2.bf16.xpose.msra.mxu0 0
        %369 = vmatprep.subr.bf16.mxu0 0
        %370 = vmatpush2.bf16.xpose.msra.mxu0 0
        %371 = vmatprep.subr.bf16.mxu0 0
        %372 = vmatpush2.bf16.xpose.msra.mxu0 0
        %373 = vmatprep.subr.bf16.mxu0 0
        %374 = vmatpush2.bf16.xpose.msra.mxu0 0
        %375 = vmatprep.subr.bf16.mxu0 0
        %376 = vmatpush2.bf16.xpose.msra.mxu0 0
        %377 = vmatprep.subr.bf16.mxu0 0
        %378 = vmatpush2.bf16.xpose.msra.mxu0 0
        %379 = vmatprep.subr.bf16.mxu0 0
        %380 = vmatpush2.bf16.xpose.msra.mxu0 0
        %381 = vmatprep.mubr.bf16.mxu0 0
        %382 = vmatmul.mubr.bf16.gmra.mxu0 %v344
        %v383 = vpop.f32.mrf.mxu0
        %v384 = vadd.f32 %v337, %v383
        %v385 = vpop.f32.mrf.mxu0
        %v386 = vpop.f32.mrf.mxu0
        %v387 = vpop.f32.mrf.mxu0
        %388 = vdwg.mxu0
        %v389 = vsel %vm342, %v384, -inf
        %390 = vmax.xlane.f32.xlu0 %v389
        %v391 = vpop.xlane.xlu0 %390
        %v392 = vsub.f32 %v384, %v391
        %v393 = vmul.f32 %v392, 1.442695
        %v394 = vpow.pop %v393
        %v395 = vsel %vm342, %v394, 0.0
        %396 = vadd.xlane.f32.xlu0 %v395
        %v397 = vpop.xlane.xlu0 %396
        %v398 = vrcp.pop %v397
        %v399 = vpack.c.bf16 %v394, %v394
        %400 = vrot.lane.b32.xlu0 %v331, 64
        %v401 = vpop.permute.xlu0 %400
        %v403 = vsel %vm342, %v399, 0
        %vm405 = vcmask 1043456
        %v407 = vsel %vm405, %v401, 0
        %409 = vmatprep.subr.bf16.mxu0 0
        %410 = vmatpush1.bf16.msra.mxu0 0
        %411 = vmatprep.subr.bf16.mxu0 0
        %412 = vmatpush1.bf16.msra.mxu0 0
        %413 = vmatprep.subr.bf16.mxu0 0
        %414 = vmatpush1.bf16.msra.mxu0 0
        %415 = vmatprep.subr.bf16.mxu0 0
        %416 = vmatpush1.bf16.msra.mxu0 0
        %417 = vmatprep.subr.bf16.mxu0 0
        %418 = vmatpush1.bf16.msra.mxu0 0
        %419 = vmatprep.subr.bf16.mxu0 0
        %420 = vmatpush1.bf16.msra.mxu0 0
        %421 = vmatprep.subr.bf16.mxu0 0
        %422 = vmatpush1.bf16.msra.mxu0 0
        %423 = vmatprep.subr.bf16.mxu0 0
        %424 = vmatpush1.bf16.msra.mxu0 %v407
        %425 = vmatprep.subr.bf16.mxu0 0
        %426 = vmatpush2.bf16.msra.mxu0 0
        %427 = vmatprep.subr.bf16.mxu0 0
        %428 = vmatpush2.bf16.msra.mxu0 0
        %429 = vmatprep.subr.bf16.mxu0 0
        %430 = vmatpush2.bf16.msra.mxu0 0
        %431 = vmatprep.subr.bf16.mxu0 0
        %432 = vmatpush2.bf16.msra.mxu0 0
        %433 = vmatprep.subr.bf16.mxu0 0
        %434 = vmatpush2.bf16.msra.mxu0 0
        %435 = vmatprep.subr.bf16.mxu0 0
        %436 = vmatpush2.bf16.msra.mxu0 0
        %437 = vmatprep.subr.bf16.mxu0 0
        %438 = vmatpush2.bf16.msra.mxu0 0
        %439 = vmatprep.subr.bf16.mxu0 0
        %440 = vmatpush2.bf16.msra.mxu0 0
        %441 = vmatprep.mubr.bf16.mxu0 0
        %442 = vmatmul.mubr.bf16.gmra.mxu0 %v403
        %v443 = vpop.f32.mrf.mxu0
        %v444 = vadd.f32 0.0, %v443
        %v445 = vpop.f32.mrf.mxu0
        %v446 = vpop.f32.mrf.mxu0
        %v447 = vpop.f32.mrf.mxu0
        %448 = vdwg.mxu0
        %v449 = vmul.f32 %v444, %v398
        %450 = vst.msk [vmem:[%s260] sm:$0xff] %vm342, %v449
        %451 = vrot.lane.b32.xlu0 %v331, 120
        %v452 = vpop.permute.xlu0 %451
        %453 = vrot.lane.b32.xlu0 %v331, 88
        %v454 = vpop.permute.xlu0 %453
        %v456 = vsel %vm342, %v452, 0
        %v459 = vsel %vm342, %v454, 0
        %461 = vmatprep.subr.bf16.mxu0 0
        %462 = vmatpush1.bf16.xpose.msra.mxu0 0
        %463 = vmatprep.subr.bf16.mxu0 0
        %464 = vmatpush1.bf16.xpose.msra.mxu0 0
        %465 = vmatprep.subr.bf16.mxu0 0
        %466 = vmatpush1.bf16.xpose.msra.mxu0 0
        %467 = vmatprep.subr.bf16.mxu0 0
        %468 = vmatpush1.bf16.xpose.msra.mxu0 0
        %469 = vmatprep.subr.bf16.mxu0 0
        %470 = vmatpush1.bf16.xpose.msra.mxu0 0
        %471 = vmatprep.subr.bf16.mxu0 0
        %472 = vmatpush1.bf16.xpose.msra.mxu0 0
        %473 = vmatprep.subr.bf16.mxu0 0
        %474 = vmatpush1.bf16.xpose.msra.mxu0 0
        %475 = vmatprep.subr.bf16.mxu0 0
        %476 = vmatpush1.bf16.xpose.msra.mxu0 %v459
        %477 = vmatprep.subr.bf16.mxu0 0
        %478 = vmatpush2.bf16.xpose.msra.mxu0 0
        %479 = vmatprep.subr.bf16.mxu0 0
        %480 = vmatpush2.bf16.xpose.msra.mxu0 0
        %481 = vmatprep.subr.bf16.mxu0 0
        %482 = vmatpush2.bf16.xpose.msra.mxu0 0
        %483 = vmatprep.subr.bf16.mxu0 0
        %484 = vmatpush2.bf16.xpose.msra.mxu0 0
        %485 = vmatprep.subr.bf16.mxu0 0
        %486 = vmatpush2.bf16.xpose.msra.mxu0 0
        %487 = vmatprep.subr.bf16.mxu0 0
        %488 = vmatpush2.bf16.xpose.msra.mxu0 0
        %489 = vmatprep.subr.bf16.mxu0 0
        %490 = vmatpush2.bf16.xpose.msra.mxu0 0
        %491 = vmatprep.subr.bf16.mxu0 0
        %492 = vmatpush2.bf16.xpose.msra.mxu0 0
        %493 = vmatprep.mubr.bf16.mxu0 0
        %494 = vmatmul.mubr.bf16.gmra.mxu0 %v456
        %v495 = vpop.f32.mrf.mxu0
        %v496 = vadd.f32 %v337, %v495
        %v497 = vpop.f32.mrf.mxu0
        %v498 = vpop.f32.mrf.mxu0
        %v499 = vpop.f32.mrf.mxu0
        %500 = vdwg.mxu0
        %v501 = vsel %vm342, %v496, -inf
        %502 = vmax.xlane.f32.xlu0 %v501
        %v503 = vpop.xlane.xlu0 %502
        %v504 = vsub.f32 %v496, %v503
        %v505 = vmul.f32 %v504, 1.442695
        %v506 = vpow.pop %v505
        %v507 = vsel %vm342, %v506, 0.0
        %508 = vadd.xlane.f32.xlu0 %v507
        %v509 = vpop.xlane.xlu0 %508
        %v510 = vrcp.pop %v509
        %v511 = vpack.c.bf16 %v506, %v506
        %512 = vrot.lane.b32.xlu0 %v331, 56
        %v513 = vpop.permute.xlu0 %512
        %v515 = vsel %vm342, %v511, 0
        %v518 = vsel %vm405, %v513, 0
        %520 = vmatprep.subr.bf16.mxu0 0
        %521 = vmatpush1.bf16.msra.mxu0 0
        %522 = vmatprep.subr.bf16.mxu0 0
        %523 = vmatpush1.bf16.msra.mxu0 0
        %524 = vmatprep.subr.bf16.mxu0 0
        %525 = vmatpush1.bf16.msra.mxu0 0
        %526 = vmatprep.subr.bf16.mxu0 0
        %527 = vmatpush1.bf16.msra.mxu0 0
        %528 = vmatprep.subr.bf16.mxu0 0
        %529 = vmatpush1.bf16.msra.mxu0 0
        %530 = vmatprep.subr.bf16.mxu0 0
        %531 = vmatpush1.bf16.msra.mxu0 0
        %532 = vmatprep.subr.bf16.mxu0 0
        %533 = vmatpush1.bf16.msra.mxu0 0
        %534 = vmatprep.subr.bf16.mxu0 0
        %535 = vmatpush1.bf16.msra.mxu0 %v518
        %536 = vmatprep.subr.bf16.mxu0 0
        %537 = vmatpush2.bf16.msra.mxu0 0
        %538 = vmatprep.subr.bf16.mxu0 0
        %539 = vmatpush2.bf16.msra.mxu0 0
        %540 = vmatprep.subr.bf16.mxu0 0
        %541 = vmatpush2.bf16.msra.mxu0 0
        %542 = vmatprep.subr.bf16.mxu0 0
        %543 = vmatpush2.bf16.msra.mxu0 0
        %544 = vmatprep.subr.bf16.mxu0 0
        %545 = vmatpush2.bf16.msra.mxu0 0
        %546 = vmatprep.subr.bf16.mxu0 0
        %547 = vmatpush2.bf16.msra.mxu0 0
        %548 = vmatprep.subr.bf16.mxu0 0
        %549 = vmatpush2.bf16.msra.mxu0 0
        %550 = vmatprep.subr.bf16.mxu0 0
        %551 = vmatpush2.bf16.msra.mxu0 0
        %552 = vmatprep.mubr.bf16.mxu0 0
        %553 = vmatmul.mubr.bf16.gmra.mxu0 %v515
        %v554 = vpop.f32.mrf.mxu0
        %v555 = vadd.f32 0.0, %v554
        %v556 = vpop.f32.mrf.mxu0
        %v557 = vpop.f32.mrf.mxu0
        %v558 = vpop.f32.mrf.mxu0
        %559 = vdwg.mxu0
        %v560 = vmul.f32 %v555, %v510
        %562 = vrot.lane.b32.xlu0 %v560, 8
        %v563 = vpop.permute.xlu0 %562
        %vm565 = vcmask 130112
        %566 = vst.msk [vmem:[%s260] sm:$0xff] %vm565, %v563
        %567 = vrot.lane.b32.xlu0 %v331, 112
        %v568 = vpop.permute.xlu0 %567
        %569 = vrot.lane.b32.xlu0 %v331, 80
        %v570 = vpop.permute.xlu0 %569
        %v572 = vsel %vm342, %v568, 0
        %v575 = vsel %vm342, %v570, 0
        %577 = vmatprep.subr.bf16.mxu0 0
        %578 = vmatpush1.bf16.xpose.msra.mxu0 0
        %579 = vmatprep.subr.bf16.mxu0 0
        %580 = vmatpush1.bf16.xpose.msra.mxu0 0
        %581 = vmatprep.subr.bf16.mxu0 0
        %582 = vmatpush1.bf16.xpose.msra.mxu0 0
        %583 = vmatprep.subr.bf16.mxu0 0
        %584 = vmatpush1.bf16.xpose.msra.mxu0 0
        %585 = vmatprep.subr.bf16.mxu0 0
        %586 = vmatpush1.bf16.xpose.msra.mxu0 0
        %587 = vmatprep.subr.bf16.mxu0 0
        %588 = vmatpush1.bf16.xpose.msra.mxu0 0
        %589 = vmatprep.subr.bf16.mxu0 0
        %590 = vmatpush1.bf16.xpose.msra.mxu0 0
        %591 = vmatprep.subr.bf16.mxu0 0
        %592 = vmatpush1.bf16.xpose.msra.mxu0 %v575
        %593 = vmatprep.subr.bf16.mxu0 0
        %594 = vmatpush2.bf16.xpose.msra.mxu0 0
        %595 = vmatprep.subr.bf16.mxu0 0
        %596 = vmatpush2.bf16.xpose.msra.mxu0 0
        %597 = vmatprep.subr.bf16.mxu0 0
        %598 = vmatpush2.bf16.xpose.msra.mxu0 0
        %599 = vmatprep.subr.bf16.mxu0 0
        %600 = vmatpush2.bf16.xpose.msra.mxu0 0
        %601 = vmatprep.subr.bf16.mxu0 0
        %602 = vmatpush2.bf16.xpose.msra.mxu0 0
        %603 = vmatprep.subr.bf16.mxu0 0
        %604 = vmatpush2.bf16.xpose.msra.mxu0 0
        %605 = vmatprep.subr.bf16.mxu0 0
        %606 = vmatpush2.bf16.xpose.msra.mxu0 0
        %607 = vmatprep.subr.bf16.mxu0 0
        %608 = vmatpush2.bf16.xpose.msra.mxu0 0
        %609 = vmatprep.mubr.bf16.mxu0 0
        %610 = vmatmul.mubr.bf16.gmra.mxu0 %v572
        %v611 = vpop.f32.mrf.mxu0
        %v612 = vadd.f32 %v337, %v611
        %v613 = vpop.f32.mrf.mxu0
        %v614 = vpop.f32.mrf.mxu0
        %v615 = vpop.f32.mrf.mxu0
        %616 = vdwg.mxu0
        %v617 = vsel %vm342, %v612, -inf
        %618 = vmax.xlane.f32.xlu0 %v617
        %v619 = vpop.xlane.xlu0 %618
        %v620 = vsub.f32 %v612, %v619
        %v621 = vmul.f32 %v620, 1.442695
        %v622 = vpow.pop %v621
        %v623 = vsel %vm342, %v622, 0.0
        %624 = vadd.xlane.f32.xlu0 %v623
        %v625 = vpop.xlane.xlu0 %624
        %v626 = vrcp.pop %v625
        %v627 = vpack.c.bf16 %v622, %v622
        %628 = vrot.lane.b32.xlu0 %v331, 48
        %v629 = vpop.permute.xlu0 %628
        %v631 = vsel %vm342, %v627, 0
        %v634 = vsel %vm405, %v629, 0
        %636 = vmatprep.subr.bf16.mxu0 0
        %637 = vmatpush1.bf16.msra.mxu0 0
        %638 = vmatprep.subr.bf16.mxu0 0
        %639 = vmatpush1.bf16.msra.mxu0 0
        %640 = vmatprep.subr.bf16.mxu0 0
        %641 = vmatpush1.bf16.msra.mxu0 0
        %642 = vmatprep.subr.bf16.mxu0 0
        %643 = vmatpush1.bf16.msra.mxu0 0
        %644 = vmatprep.subr.bf16.mxu0 0
        %645 = vmatpush1.bf16.msra.mxu0 0
        %646 = vmatprep.subr.bf16.mxu0 0
        %647 = vmatpush1.bf16.msra.mxu0 0
        %648 = vmatprep.subr.bf16.mxu0 0
        %649 = vmatpush1.bf16.msra.mxu0 0
        %650 = vmatprep.subr.bf16.mxu0 0
        %651 = vmatpush1.bf16.msra.mxu0 %v634
        %652 = vmatprep.subr.bf16.mxu0 0
        %653 = vmatpush2.bf16.msra.mxu0 0
        %654 = vmatprep.subr.bf16.mxu0 0
        %655 = vmatpush2.bf16.msra.mxu0 0
        %656 = vmatprep.subr.bf16.mxu0 0
        %657 = vmatpush2.bf16.msra.mxu0 0
        %658 = vmatprep.subr.bf16.mxu0 0
        %659 = vmatpush2.bf16.msra.mxu0 0
        %660 = vmatprep.subr.bf16.mxu0 0
        %661 = vmatpush2.bf16.msra.mxu0 0
        %662 = vmatprep.subr.bf16.mxu0 0
        %663 = vmatpush2.bf16.msra.mxu0 0
        %664 = vmatprep.subr.bf16.mxu0 0
        %665 = vmatpush2.bf16.msra.mxu0 0
        %666 = vmatprep.subr.bf16.mxu0 0
        %667 = vmatpush2.bf16.msra.mxu0 0
        %668 = vmatprep.mubr.bf16.mxu0 0
        %669 = vmatmul.mubr.bf16.gmra.mxu0 %v631
        %v670 = vpop.f32.mrf.mxu0
        %v671 = vadd.f32 0.0, %v670
        %v672 = vpop.f32.mrf.mxu0
        %v673 = vpop.f32.mrf.mxu0
        %v674 = vpop.f32.mrf.mxu0
        %675 = vdwg.mxu0
        %v676 = vmul.f32 %v671, %v626
        %678 = vrot.lane.b32.xlu0 %v676, 16
        %v679 = vpop.permute.xlu0 %678
        %vm681 = vcmask 195712
        %682 = vst.msk [vmem:[%s260] sm:$0xff] %vm681, %v679
        %683 = vrot.lane.b32.xlu0 %v331, 104
        %v684 = vpop.permute.xlu0 %683
        %685 = vrot.lane.b32.xlu0 %v331, 72
        %v686 = vpop.permute.xlu0 %685
        %v688 = vsel %vm342, %v684, 0
        %v691 = vsel %vm342, %v686, 0
        %693 = vmatprep.subr.bf16.mxu0 0
        %694 = vmatpush1.bf16.xpose.msra.mxu0 0
        %695 = vmatprep.subr.bf16.mxu0 0
        %696 = vmatpush1.bf16.xpose.msra.mxu0 0
        %697 = vmatprep.subr.bf16.mxu0 0
        %698 = vmatpush1.bf16.xpose.msra.mxu0 0
        %699 = vmatprep.subr.bf16.mxu0 0
        %700 = vmatpush1.bf16.xpose.msra.mxu0 0
        %701 = vmatprep.subr.bf16.mxu0 0
        %702 = vmatpush1.bf16.xpose.msra.mxu0 0
        %703 = vmatprep.subr.bf16.mxu0 0
        %704 = vmatpush1.bf16.xpose.msra.mxu0 0
        %705 = vmatprep.subr.bf16.mxu0 0
        %706 = vmatpush1.bf16.xpose.msra.mxu0 0
        %707 = vmatprep.subr.bf16.mxu0 0
        %708 = vmatpush1.bf16.xpose.msra.mxu0 %v691
        %709 = vmatprep.subr.bf16.mxu0 0
        %710 = vmatpush2.bf16.xpose.msra.mxu0 0
        %711 = vmatprep.subr.bf16.mxu0 0
        %712 = vmatpush2.bf16.xpose.msra.mxu0 0
        %713 = vmatprep.subr.bf16.mxu0 0
        %714 = vmatpush2.bf16.xpose.msra.mxu0 0
        %715 = vmatprep.subr.bf16.mxu0 0
        %716 = vmatpush2.bf16.xpose.msra.mxu0 0
        %717 = vmatprep.subr.bf16.mxu0 0
        %718 = vmatpush2.bf16.xpose.msra.mxu0 0
        %719 = vmatprep.subr.bf16.mxu0 0
        %720 = vmatpush2.bf16.xpose.msra.mxu0 0
        %721 = vmatprep.subr.bf16.mxu0 0
        %722 = vmatpush2.bf16.xpose.msra.mxu0 0
        %723 = vmatprep.subr.bf16.mxu0 0
        %724 = vmatpush2.bf16.xpose.msra.mxu0 0
        %725 = vmatprep.mubr.bf16.mxu0 0
        %726 = vmatmul.mubr.bf16.gmra.mxu0 %v688
        %v727 = vpop.f32.mrf.mxu0
        %v728 = vadd.f32 %v337, %v727
        %v729 = vpop.f32.mrf.mxu0
        %v730 = vpop.f32.mrf.mxu0
        %v731 = vpop.f32.mrf.mxu0
        %732 = vdwg.mxu0
        %v733 = vsel %vm342, %v728, -inf
        %734 = vmax.xlane.f32.xlu0 %v733
        %v735 = vpop.xlane.xlu0 %734
        %v736 = vsub.f32 %v728, %v735
        %v737 = vmul.f32 %v736, 1.442695
        %v738 = vpow.pop %v737
        %v739 = vsel %vm342, %v738, 0.0
        %740 = vadd.xlane.f32.xlu0 %v739
        %v741 = vpop.xlane.xlu0 %740
        %v742 = vrcp.pop %v741
        %v743 = vpack.c.bf16 %v738, %v738
        %744 = vrot.lane.b32.xlu0 %v331, 40
        %v745 = vpop.permute.xlu0 %744
        %v747 = vsel %vm342, %v743, 0
        %v750 = vsel %vm405, %v745, 0
        %752 = vmatprep.subr.bf16.mxu0 0
        %753 = vmatpush1.bf16.msra.mxu0 0
        %754 = vmatprep.subr.bf16.mxu0 0
        %755 = vmatpush1.bf16.msra.mxu0 0
        %756 = vmatprep.subr.bf16.mxu0 0
        %757 = vmatpush1.bf16.msra.mxu0 0
        %758 = vmatprep.subr.bf16.mxu0 0
        %759 = vmatpush1.bf16.msra.mxu0 0
        %760 = vmatprep.subr.bf16.mxu0 0
        %761 = vmatpush1.bf16.msra.mxu0 0
        %762 = vmatprep.subr.bf16.mxu0 0
        %763 = vmatpush1.bf16.msra.mxu0 0
        %764 = vmatprep.subr.bf16.mxu0 0
        %765 = vmatpush1.bf16.msra.mxu0 0
        %766 = vmatprep.subr.bf16.mxu0 0
        %767 = vmatpush1.bf16.msra.mxu0 %v750
        %768 = vmatprep.subr.bf16.mxu0 0
        %769 = vmatpush2.bf16.msra.mxu0 0
        %770 = vmatprep.subr.bf16.mxu0 0
        %771 = vmatpush2.bf16.msra.mxu0 0
        %772 = vmatprep.subr.bf16.mxu0 0
        %773 = vmatpush2.bf16.msra.mxu0 0
        %774 = vmatprep.subr.bf16.mxu0 0
        %775 = vmatpush2.bf16.msra.mxu0 0
        %776 = vmatprep.subr.bf16.mxu0 0
        %777 = vmatpush2.bf16.msra.mxu0 0
        %778 = vmatprep.subr.bf16.mxu0 0
        %779 = vmatpush2.bf16.msra.mxu0 0
        %780 = vmatprep.subr.bf16.mxu0 0
        %781 = vmatpush2.bf16.msra.mxu0 0
        %782 = vmatprep.subr.bf16.mxu0 0
        %783 = vmatpush2.bf16.msra.mxu0 0
        %784 = vmatprep.mubr.bf16.mxu0 0
        %785 = vmatmul.mubr.bf16.gmra.mxu0 %v747
        %v786 = vpop.f32.mrf.mxu0
        %v787 = vadd.f32 0.0, %v786
        %v788 = vpop.f32.mrf.mxu0
        %v789 = vpop.f32.mrf.mxu0
        %v790 = vpop.f32.mrf.mxu0
        %791 = vdwg.mxu0
        %v792 = vmul.f32 %v787, %v742
        %794 = vrot.lane.b32.xlu0 %v792, 24
        %v795 = vpop.permute.xlu0 %794
        %vm797 = vcmask 261312
        %798 = vst.msk [vmem:[%s260] sm:$0xff] %vm797, %v795
        %s799 = sand.u32 %s126, 1
        %s800 = scalar_lea.sflag [#allocation4], %s799
        %s801 = sand.u32 %s126, 1
        %s802 = smul.addr %s801, 8
        %s803 = scalar_lea.vmem [#allocation8], %s802
        // Predicated region
        $region49: #{tpu_custom_call.1} parent=35 // pred_check
          %p804 = pneg %p136
        $region50: #{tpu_custom_call.1} parent=35 // pred_check_branch
          %806 = sbr.rel (%p804) target = $region52
        $region51: #{tpu_custom_call.1} parent=35 // pred_region
          %s808 = ssub.s32 128, 128
          %809 = vsyncadd %s800, %s808
          %s810 = smul.addr %s24, 128
          %s811 = scalar_lea.hbm %s4, %s810
          %s813 = sshll.u32 %s803, 4
          %s814 = int_to_ptr.vmem [resolvable:$true] %s813
          %816 = dma.vmem_to_hbm [thread:$0]  %s814, 128, %s811, %s800
        $region52: #{tpu_custom_call.1} parent=35 // pred_fallthru
          _
      $region36: #{tpu_custom_call.1} parent=5 // pred_fallthru
        _
      %p817 = scmp.le.s32.totalorder 2, %s19
      // Predicated region
      $region53: #{tpu_custom_call.1} parent=5 // pred_check
        %p818 = pneg %p817
      $region54: #{tpu_custom_call.1} parent=5 // pred_check_branch
        %820 = sbr.rel (%p818) target = $region56
      $region55: #{tpu_custom_call.1} parent=5 // pred_region
        %s821 = ssub.s32 %s19, 2
        // Predicated region
        $region57: #{tpu_custom_call.1} parent=55 // pred_check
          %p822 = pneg %p142
        $region58: #{tpu_custom_call.1} parent=55 // pred_check_branch
          %824 = sbr.rel (%p822) target = $region60
        $region59: #{tpu_custom_call.1} parent=55 // pred_region
          %s825 = sand.u32 %s127, 1
          %s826 = scalar_lea.sflag [#allocation4], %s825
          %s827 = sand.u32 %s127, 1
          %s828 = smul.addr %s827, 8
          %s829 = scalar_lea.vmem [#allocation8], %s828
          %830 = dma.done %s826, 128
        $region60: #{tpu_custom_call.1} parent=55 // pred_fallthru
          _
      $region56: #{tpu_custom_call.1} parent=5 // pred_fallthru
        _
    $region6: #{tpu_custom_call.1} parent=1 // loop_footer
      %s23 = sadd.s32 1, %s19
    $region7: #{tpu_custom_call.1} parent=1 // loop_footer_branch
      %18 = sbr.rel target = $region3
    $region8: #{tpu_custom_call.1} parent=1 // loop_exit
      _
    %831 = vsyncpa [#allocation3], 1
    %s832 = scalar_lea.sflag [#allocation3], 1
    %833 = vsyncpa %s832, 1
    %834 = vsyncpa [#allocation6], 1
    %s835 = scalar_lea.sflag [#allocation6], 1
    %836 = vsyncpa %s835, 1
    %837 = vsyncpa [#allocation4], 1
    %s838 = scalar_lea.sflag [#allocation4], 1
    %839 = vsyncpa %s838, 1

// kernel: tpu_custom_call.1
$region0: #{tpu_custom_call.1}
  #allocation0 [shape = 'u32[]', space=smem, size = 0x4, offset = 0x4, fixed_abs, tag = 'smem constant byte address 0x4 - core index']
  #allocation1 [shape = 'u32[144,128]{1,0:T(1,128)}', space=vmem, size = 0x12000, scoped, tag = 'internal scratch']
  %s0 = inlined_call_operand.hbm [shape: f32[2,8,32], index: 0, kind: input, shape index: {}]
  %s1 = inlined_call_operand.hbm [shape: f32[2,1,8], index: 1, kind: input, shape index: {}]
  %s2 = inlined_call_operand.hbm [shape: bf16[32,96], index: 2, kind: input, shape index: {}]
  %s3 = inlined_call_operand.vmem [shape: f32[1,96], index: 3, kind: input, shape index: {}]
  %s4 = inlined_call_operand.hbm [shape: f32[2,8,32], index: 4, kind: output, shape index: {}]
  %s5 = sld [smem:[#allocation0]]
  $region61: #{tpu_custom_call.1} parent=0
    _
  %s7 = ssub.s32 1, %s5
  %s8 = scalar_select 0, %s7, %s5
  $region1: #{tpu_custom_call.1} parent=0
    #allocation2 [shape = 'u8[8192]{0}', space=vmem, size = 0x2000, scoped, tag = 'input window, operand 0']
    #allocation3 [shape = 's32[2]{0}', space=sflag, size = 0x8, scoped, tag = 'scoped memory for tpu_custom_call.1']
    #allocation4 [shape = 's32[2]{0}', space=sflag, size = 0x8, scoped, tag = 'scoped memory for tpu_custom_call.1']
    #allocation5 [shape = 'u8[1024]{0}', space=vmem, size = 0x400, scoped, tag = 'input window, operand 1']
    #allocation6 [shape = 's32[2]{0}', space=sflag, size = 0x8, scoped, tag = 'scoped memory for tpu_custom_call.1']
    #allocation7 [shape = 'u8[8192]{0}', space=vmem, size = 0x2000, scoped, tag = 'input window, operand 2, single buffered']
    #allocation8 [shape = 'u8[8192]{0}', space=vmem, size = 0x2000, scoped, tag = 'output window, operand 0']
    %9 = vsyncpa [#allocation3], 0
    %s10 = scalar_lea.sflag [#allocation3], 1
    %11 = vsyncpa %s10, 0
    %12 = vsyncpa [#allocation6], 0
    %s13 = scalar_lea.sflag [#allocation6], 1
    %14 = vsyncpa %s13, 0
    %15 = vsyncpa [#allocation4], 0
    %s16 = scalar_lea.sflag [#allocation4], 1
    %17 = vsyncpa %s16, 0
    loop: start=0, step=1, limit=4
    $region2: #{tpu_custom_call.1} parent=1 // loop_pre_header
      _
    $region3: #{tpu_custom_call.1} parent=1 // loop_header
      %s19 = sphi 0, %s23
      %p20 = scmp.ge.s32.totalorder %s19, 4
      %s29 = sphi 0, %s31
      %s32 = sphi 0, %s29
      %s33 = sphi 0, %s32
      %s49 = sphi 0, %s33
      %s55 = sphi 0, %s57
      %s58 = sphi 0, %s55
      %s59 = sphi 0, %s58
      %s75 = sphi 0, %s59
      %s79 = sphi 0, %s79
      %s81 = sphi 0, %s79
      %s82 = sphi 0, %s81
      %s96 = sphi 0, %s82
      %s100 = sphi 0, %s100
      %s102 = sphi 0, %s100
      %s103 = sphi 0, %s102
      %s117 = sphi 0, %s103
      %s123 = sphi 0, %s125
      %s126 = sphi 0, %s123
      %s127 = sphi 0, %s126
      %s143 = sphi 0, %s127
    $region4: #{tpu_custom_call.1} parent=1 // loop_header_branch
      %22 = sbr.rel (%p20) target = $region8
    $region5: #{tpu_custom_call.1} parent=1 // loop_body
      %s24 = ssub.s32 %s19, 1
      %s25 = ssub.s32 %s19, 2
      %s26 = sadd.s32 %s19, 1
      %s27 = ssub.s32 %s19, %s26
      %p28 = scmp.eq.s32.totalorder %s27, 0
      %s30 = sadd.s32 %s29, 1
      %s31 = scalar_select %p28, %s29, %s30
      %p34 = pneg %p28
      %p35 = scmp.eq.s32.totalorder %s19, 1
      %p36 = por %p34, %p35
      %p37 = scmp.ne.s32.totalorder %s29, %s32
      %p38 = scmp.eq.s32.totalorder %s19, 0
      %p39 = por %p37, %p38
      %p40 = scmp.ne.s32.totalorder %s29, %s32
      %p41 = scmp.eq.s32.totalorder %s24, 1
      %p42 = por %p40, %p41
      %p43 = scmp.ne.s32.totalorder %s32, %s33
      %p44 = scmp.eq.s32.totalorder %s24, 0
      %p45 = por %p43, %p44
      %p46 = scmp.ne.s32.totalorder %s32, %s33
      %p47 = scmp.eq.s32.totalorder %s25, 1
      %p48 = por %p46, %p47
      %p50 = scmp.ne.s32.totalorder %s33, %s49
      %p51 = scmp.eq.s32.totalorder %s25, 0
      %p52 = por %p50, %p51
      %s53 = ssub.s32 %s19, %s26
      %p54 = scmp.eq.s32.totalorder %s53, 0
      %s56 = sadd.s32 %s55, 1
      %s57 = scalar_select %p54, %s55, %s56
      %p60 = pneg %p54
      %p61 = scmp.eq.s32.totalorder %s19, 1
      %p62 = por %p60, %p61
      %p63 = scmp.ne.s32.totalorder %s55, %s58
      %p64 = scmp.eq.s32.totalorder %s19, 0
      %p65 = por %p63, %p64
      %p66 = scmp.ne.s32.totalorder %s55, %s58
      %p67 = scmp.eq.s32.totalorder %s24, 1
      %p68 = por %p66, %p67
      %p69 = scmp.ne.s32.totalorder %s58, %s59
      %p70 = scmp.eq.s32.totalorder %s24, 0
      %p71 = por %p69, %p70
      %p72 = scmp.ne.s32.totalorder %s58, %s59
      %p73 = scmp.eq.s32.totalorder %s25, 1
      %p74 = por %p72, %p73
      %p76 = scmp.ne.s32.totalorder %s59, %s75
      %p77 = scmp.eq.s32.totalorder %s25, 0
      %p78 = por %p76, %p77
      %s80 = sadd.s32 %s79, 1
      %p83 = scmp.eq.s32.totalorder %s19, 1
      %p84 = scmp.ne.s32.totalorder %s79, %s81
      %p85 = scmp.eq.s32.totalorder %s19, 0
      %p86 = por %p84, %p85
      %p87 = scmp.ne.s32.totalorder %s79, %s81
      %p88 = scmp.eq.s32.totalorder %s24, 1
      %p89 = por %p87, %p88
      %p90 = scmp.ne.s32.totalorder %s81, %s82
      %p91 = scmp.eq.s32.totalorder %s24, 0
      %p92 = por %p90, %p91
      %p93 = scmp.ne.s32.totalorder %s81, %s82
      %p94 = scmp.eq.s32.totalorder %s25, 1
      %p95 = por %p93, %p94
      %p97 = scmp.ne.s32.totalorder %s82, %s96
      %p98 = scmp.eq.s32.totalorder %s25, 0
      %p99 = por %p97, %p98
      %s101 = sadd.s32 %s100, 1
      %p104 = scmp.eq.s32.totalorder %s19, 1
      %p105 = scmp.ne.s32.totalorder %s100, %s102
      %p106 = scmp.eq.s32.totalorder %s19, 0
      %p107 = por %p105, %p106
      %p108 = scmp.ne.s32.totalorder %s100, %s102
      %p109 = scmp.eq.s32.totalorder %s24, 1
      %p110 = por %p108, %p109
      %p111 = scmp.ne.s32.totalorder %s102, %s103
      %p112 = scmp.eq.s32.totalorder %s24, 0
      %p113 = por %p111, %p112
      %p114 = scmp.ne.s32.totalorder %s102, %s103
      %p115 = scmp.eq.s32.totalorder %s25, 1
      %p116 = por %p114, %p115
      %p118 = scmp.ne.s32.totalorder %s103, %s117
      %p119 = scmp.eq.s32.totalorder %s25, 0
      %p120 = por %p118, %p119
      %s121 = ssub.s32 %s19, %s26
      %p122 = scmp.eq.s32.totalorder %s121, 0
      %s124 = sadd.s32 %s123, 1
      %s125 = scalar_select %p122, %s123, %s124
      %p128 = pneg %p122
      %p129 = scmp.eq.s32.totalorder %s19, 1
      %p130 = por %p128, %p129
      %p131 = scmp.ne.s32.totalorder %s123, %s126
      %p132 = scmp.eq.s32.totalorder %s19, 0
      %p133 = por %p131, %p132
      %p134 = scmp.ne.s32.totalorder %s123, %s126
      %p135 = scmp.eq.s32.totalorder %s24, 1
      %p136 = por %p134, %p135
      %p137 = scmp.ne.s32.totalorder %s126, %s127
      %p138 = scmp.eq.s32.totalorder %s24, 0
      %p139 = por %p137, %p138
      %p140 = scmp.ne.s32.totalorder %s126, %s127
      %p141 = scmp.eq.s32.totalorder %s25, 1
      %p142 = por %p140, %p141
      %p144 = scmp.ne.s32.totalorder %s127, %s143
      %p145 = scmp.eq.s32.totalorder %s25, 0
      %p146 = por %p144, %p145
      %p147 = scmp.le.s32.totalorder 1, %s19
      %p148 = scmp.lt.s32.totalorder %s19, 3
      %p149 = pnand %p147, %p148
      %p150 = pneg %p149
      // Predicated region
      $region9: #{tpu_custom_call.1} parent=5 // pred_check
        _
      $region10: #{tpu_custom_call.1} parent=5 // pred_check_branch
        %152 = sbr.rel (%p149) target = $region12
      $region11: #{tpu_custom_call.1} parent=5 // pred_region
        %s153 = ssub.s32 %s19, 1
        // Predicated region
        $region13: #{tpu_custom_call.1} parent=11 // pred_check
          %p154 = pneg %p92
        $region14: #{tpu_custom_call.1} parent=11 // pred_check_branch
          %156 = sbr.rel (%p154) target = $region16
        $region15: #{tpu_custom_call.1} parent=11 // pred_region
          %s158 = ssub.s32 256, 256
          %159 = vsyncadd [#allocation6], %s158
          %s160 = sshll.u32 [#allocation7], 4
          %s161 = int_to_ptr.vmem [resolvable:$true] %s160
          %166 = dma.hbm_to_vmem [thread:$0]  %s2, 256, %s161, [#allocation6], 64, 64, 4
        $region16: #{tpu_custom_call.1} parent=11 // pred_fallthru
          _
        // Predicated region
        $region17: #{tpu_custom_call.1} parent=11 // pred_check
          %p167 = pneg %p113
        $region18: #{tpu_custom_call.1} parent=11 // pred_check_branch
          %169 = sbr.rel (%p167) target = $region20
        $region19: #{tpu_custom_call.1} parent=11 // pred_region
          _
        $region20: #{tpu_custom_call.1} parent=11 // pred_fallthru
          _
      $region12: #{tpu_custom_call.1} parent=5 // pred_fallthru
        _
      %p170 = scmp.lt.s32.totalorder %s19, 2
      // Predicated region
      $region21: #{tpu_custom_call.1} parent=5 // pred_check
        %p171 = pneg %p170
      $region22: #{tpu_custom_call.1} parent=5 // pred_check_branch
        %173 = sbr.rel (%p171) target = $region24
      $region23: #{tpu_custom_call.1} parent=5 // pred_region
        // Predicated region
        $region25: #{tpu_custom_call.1} parent=23 // pred_check
          %p174 = pneg %p39
        $region26: #{tpu_custom_call.1} parent=23 // pred_check_branch
          %176 = sbr.rel (%p174) target = $region28
        $region27: #{tpu_custom_call.1} parent=23 // pred_region
          %s177 = sand.u32 %s29, 1
          %s178 = scalar_lea.sflag [#allocation3], %s177
          %s179 = sand.u32 %s29, 1
          %s180 = smul.addr %s179, 8
          %s181 = scalar_lea.vmem [#allocation2], %s180
          %s183 = ssub.s32 128, 128
          %184 = vsyncadd %s178, %s183
          %s185 = smul.addr %s19, 128
          %s186 = scalar_lea.hbm %s0, %s185
          %s188 = sshll.u32 %s181, 4
          %s189 = int_to_ptr.vmem [resolvable:$true] %s188
          %191 = dma.hbm_to_vmem [thread:$0]  %s186, 128, %s189, %s178
        $region28: #{tpu_custom_call.1} parent=23 // pred_fallthru
          _
        // Predicated region
        $region29: #{tpu_custom_call.1} parent=23 // pred_check
          %p192 = pneg %p65
        $region30: #{tpu_custom_call.1} parent=23 // pred_check_branch
          %194 = sbr.rel (%p192) target = $region32
        $region31: #{tpu_custom_call.1} parent=23 // pred_region
          %s195 = sand.u32 %s19, 1
          %s196 = scalar_lea.sflag [#allocation6], %s195
          %s197 = sand.u32 %s55, 1
          %s198 = scalar_lea.vmem [#allocation5], %s197
          %s200 = ssub.s32 16, 16
          %201 = vsyncadd %s196, %s200
          %s202 = smul.addr %s19, 16
          %s203 = scalar_lea.hbm %s1, %s202
          %s205 = sshll.u32 %s198, 4
          %s206 = int_to_ptr.vmem [resolvable:$true] %s205
          %208 = dma.hbm_to_vmem [thread:$0]  %s203, 16, %s206, %s196
        $region32: #{tpu_custom_call.1} parent=23 // pred_fallthru
          _
      $region24: #{tpu_custom_call.1} parent=5 // pred_fallthru
        _
      %p209 = scmp.le.s32.totalorder 1, %s19
      %p210 = scmp.lt.s32.totalorder %s19, 3
      %p211 = pnand %p209, %p210
      %p212 = pneg %p211
      // Predicated region
      $region33: #{tpu_custom_call.1} parent=5 // pred_check
        _
      $region34: #{tpu_custom_call.1} parent=5 // pred_check_branch
        %214 = sbr.rel (%p211) target = $region36
      $region35: #{tpu_custom_call.1} parent=5 // pred_region
        %s215 = ssub.s32 %s19, 1
        %s216 = sand.u32 %s32, 1
        %s217 = scalar_lea.sflag [#allocation3], %s216
        %s218 = sand.u32 %s32, 1
        %s219 = smul.addr %s218, 8
        %s220 = scalar_lea.vmem [#allocation2], %s219
        // Predicated region
        $region37: #{tpu_custom_call.1} parent=35 // pred_check
          %p221 = pneg %p45
        $region38: #{tpu_custom_call.1} parent=35 // pred_check_branch
          %223 = sbr.rel (%p221) target = $region40
        $region39: #{tpu_custom_call.1} parent=35 // pred_region
          %224 = dma.done %s217, 128
        $region40: #{tpu_custom_call.1} parent=35 // pred_fallthru
          _
        %s225 = sand.u32 %s24, 1
        %s226 = scalar_lea.sflag [#allocation6], %s225
        %s227 = sand.u32 %s58, 1
        %s228 = scalar_lea.vmem [#allocation5], %s227
        // Predicated region
        $region41: #{tpu_custom_call.1} parent=35 // pred_check
          %p229 = pneg %p71
        $region42: #{tpu_custom_call.1} parent=35 // pred_check_branch
          %231 = sbr.rel (%p229) target = $region44
        $region43: #{tpu_custom_call.1} parent=35 // pred_region
          %232 = dma.done %s226, 16
        $region44: #{tpu_custom_call.1} parent=35 // pred_fallthru
          _
        // Predicated region
        $region45: #{tpu_custom_call.1} parent=35 // pred_check
          %p233 = pneg %p92
        $region46: #{tpu_custom_call.1} parent=35 // pred_check_branch
          %235 = sbr.rel (%p233) target = $region48
        $region47: #{tpu_custom_call.1} parent=35 // pred_region
          %236 = dma.done [#allocation6], 256
        $region48: #{tpu_custom_call.1} parent=35 // pred_fallthru
          _
        %s237 = sand.u32 %s32, 1
        %s238 = scalar_lea.sflag [#allocation3], %s237
        %s239 = sand.u32 %s32, 1
        %s240 = smul.addr %s239, 8
        %s241 = scalar_lea.vmem [#allocation2], %s240
        %p242 = pneg %p45
        %p243 = pneg %p42
        %s244 = sand.u32 %s24, 1
        %s245 = scalar_lea.sflag [#allocation6], %s244
        %s246 = sand.u32 %s58, 1
        %s247 = scalar_lea.vmem [#allocation5], %s246
        %p248 = pneg %p71
        %p249 = pneg %p68
        %p250 = pneg %p92
        %p251 = pneg %p89
        %p252 = pneg %p113
        %p253 = pneg %p110
        %p254 = pneg %p139
        %p255 = pneg %p136
        %s256 = sand.u32 %s126, 1
        %s257 = scalar_lea.sflag [#allocation4], %s256
        %s258 = sand.u32 %s126, 1
        %s259 = smul.addr %s258, 8
        %s260 = scalar_lea.vmem [#allocation8], %s259
        %v262 = vld [vmem:[%s220] sm:$0xff]
        %v263 = vpack.c.bf16 %v262, %v262
        %v264 = vld [vmem:[#allocation7] sm:$0xf]
        %v265 = vld [vmem:[#allocation7 + $0x4] sm:$0xf]
        %v266 = vld [vmem:[#allocation7 + $0x8] sm:$0xf]
        %v267 = vld [vmem:[#allocation7 + $0xc] sm:$0xf]
        %v268 = vld [vmem:[%s3] sm:$0x1]
        %v270 = vlaneseq
        %v271 = vshrl.u32 %v270, 7
        %v272 = vsub.s32 0, %v271
        %v273 = vrot.slane %v268, %v272
        %v279 = vunpack.c.l.b16 %v264
        %v280 = vunpack.c.l.b16 %v265
        %v281 = vunpack.c.l.b16 %v266
        %v282 = vunpack.c.l.b16 %v267
        %v283 = vpack.c.b16 %v280, %v279
        %v284 = vpack.c.b16 %v282, %v281
        %vm287 = vcmask 261120
        %v289 = vsel %vm287, %v263, 0
        %291 = vmatprep.subr.bf16.mxu0 0
        %292 = vmatpush1.bf16.msra.mxu0 0
        %293 = vmatprep.subr.bf16.mxu0 0
        %294 = vmatpush1.bf16.msra.mxu0 0
        %295 = vmatprep.subr.bf16.mxu0 0
        %296 = vmatpush1.bf16.msra.mxu0 0
        %297 = vmatprep.subr.bf16.mxu0 0
        %298 = vmatpush1.bf16.msra.mxu0 0
        %299 = vmatprep.subr.bf16.mxu0 0
        %300 = vmatpush1.bf16.msra.mxu0 0
        %301 = vmatprep.subr.bf16.mxu0 0
        %302 = vmatpush1.bf16.msra.mxu0 0
        %303 = vmatprep.subr.bf16.mxu0 0
        %304 = vmatpush1.bf16.msra.mxu0 %v284
        %305 = vmatprep.subr.bf16.mxu0 0
        %306 = vmatpush1.bf16.msra.mxu0 %v283
        %307 = vmatprep.subr.bf16.mxu0 0
        %308 = vmatpush2.bf16.msra.mxu0 0
        %309 = vmatprep.subr.bf16.mxu0 0
        %310 = vmatpush2.bf16.msra.mxu0 0
        %311 = vmatprep.subr.bf16.mxu0 0
        %312 = vmatpush2.bf16.msra.mxu0 0
        %313 = vmatprep.subr.bf16.mxu0 0
        %314 = vmatpush2.bf16.msra.mxu0 0
        %315 = vmatprep.subr.bf16.mxu0 0
        %316 = vmatpush2.bf16.msra.mxu0 0
        %317 = vmatprep.subr.bf16.mxu0 0
        %318 = vmatpush2.bf16.msra.mxu0 0
        %319 = vmatprep.subr.bf16.mxu0 0
        %320 = vmatpush2.bf16.msra.mxu0 0
        %321 = vmatprep.subr.bf16.mxu0 0
        %322 = vmatpush2.bf16.msra.mxu0 0
        %323 = vmatprep.mubr.bf16.mxu0 0
        %324 = vmatmul.mubr.bf16.gmra.mxu0 %v289
        %v325 = vpop.f32.mrf.mxu0
        %v326 = vadd.f32 %v273, %v325
        %v327 = vpop.f32.mrf.mxu0
        %v328 = vpop.f32.mrf.mxu0
        %v329 = vpop.f32.mrf.mxu0
        %330 = vdwg.mxu0
        %v331 = vpack.c.bf16 %v326, %v326
        %v332 = vld [vmem:[%s228] sm:$0x1]
        %v334 = vlaneseq
        %v335 = vshrl.u32 %v334, 7
        %v336 = vsub.s32 0, %v335
        %v337 = vrot.slane %v332, %v336
        %340 = vrot.lane.b32.xlu0 %v331, 96
        %v341 = vpop.permute.xlu0 %340
        %vm342 = vcmask 64512
        %v344 = vsel %vm342, %v331, 0
        %v347 = vsel %vm342, %v341, 0
        %349 = vmatprep.subr.bf16.mxu0 0
        %350 = vmatpush1.bf16.xpose.msra.mxu0 0
        %351 = vmatprep.subr.bf16.mxu0 0
        %352 = vmatpush1.bf16.xpose.msra.mxu0 0
        %353 = vmatprep.subr.bf16.mxu0 0
        %354 = vmatpush1.bf16.xpose.msra.mxu0 0
        %355 = vmatprep.subr.bf16.mxu0 0
        %356 = vmatpush1.bf16.xpose.msra.mxu0 0
        %357 = vmatprep.subr.bf16.mxu0 0
        %358 = vmatpush1.bf16.xpose.msra.mxu0 0
        %359 = vmatprep.subr.bf16.mxu0 0
        %360 = vmatpush1.bf16.xpose.msra.mxu0 0
        %361 = vmatprep.subr.bf16.mxu0 0
        %362 = vmatpush1.bf16.xpose.msra.mxu0 0
        %363 = vmatprep.subr.bf16.mxu0 0
        %364 = vmatpush1.bf16.xpose.msra.mxu0 %v347
        %365 = vmatprep.subr.bf16.mxu0 0
        %366 = vmatpush2.bf16.xpose.msra.mxu0 0
        %367 = vmatprep.subr.bf16.mxu0 0
        %368 = vmatpush2.bf16.xpose.msra.mxu0 0
        %369 = vmatprep.subr.bf16.mxu0 0
        %370 = vmatpush2.bf16.xpose.msra.mxu0 0
        %371 = vmatprep.subr.bf16.mxu0 0
        %372 = vmatpush2.bf16.xpose.msra.mxu0 0
        %373 = vmatprep.subr.bf16.mxu0 0
        %374 = vmatpush2.bf16.xpose.msra.mxu0 0
        %375 = vmatprep.subr.bf16.mxu0 0
        %376 = vmatpush2.bf16.xpose.msra.mxu0 0
        %377 = vmatprep.subr.bf16.mxu0 0
        %378 = vmatpush2.bf16.xpose.msra.mxu0 0
        %379 = vmatprep.subr.bf16.mxu0 0
        %380 = vmatpush2.bf16.xpose.msra.mxu0 0
        %381 = vmatprep.mubr.bf16.mxu0 0
        %382 = vmatmul.mubr.bf16.gmra.mxu0 %v344
        %v383 = vpop.f32.mrf.mxu0
        %v384 = vadd.f32 %v337, %v383
        %v385 = vpop.f32.mrf.mxu0
        %v386 = vpop.f32.mrf.mxu0
        %v387 = vpop.f32.mrf.mxu0
        %388 = vdwg.mxu0
        %v389 = vsel %vm342, %v384, -inf
        %390 = vmax.xlane.f32.xlu0 %v389
        %v391 = vpop.xlane.xlu0 %390
        %v392 = vsub.f32 %v384, %v391
        %v393 = vmul.f32 %v392, 1.442695
        %v394 = vpow.pop %v393
        %v395 = vsel %vm342, %v394, 0.0
        %396 = vadd.xlane.f32.xlu0 %v395
        %v397 = vpop.xlane.xlu0 %396
        %v398 = vrcp.pop %v397
        %v399 = vpack.c.bf16 %v394, %v394
        %400 = vrot.lane.b32.xlu0 %v331, 64
        %v401 = vpop.permute.xlu0 %400
        %v403 = vsel %vm342, %v399, 0
        %vm405 = vcmask 1043456
        %v407 = vsel %vm405, %v401, 0
        %409 = vmatprep.subr.bf16.mxu0 0
        %410 = vmatpush1.bf16.msra.mxu0 0
        %411 = vmatprep.subr.bf16.mxu0 0
        %412 = vmatpush1.bf16.msra.mxu0 0
        %413 = vmatprep.subr.bf16.mxu0 0
        %414 = vmatpush1.bf16.msra.mxu0 0
        %415 = vmatprep.subr.bf16.mxu0 0
        %416 = vmatpush1.bf16.msra.mxu0 0
        %417 = vmatprep.subr.bf16.mxu0 0
        %418 = vmatpush1.bf16.msra.mxu0 0
        %419 = vmatprep.subr.bf16.mxu0 0
        %420 = vmatpush1.bf16.msra.mxu0 0
        %421 = vmatprep.subr.bf16.mxu0 0
        %422 = vmatpush1.bf16.msra.mxu0 0
        %423 = vmatprep.subr.bf16.mxu0 0
        %424 = vmatpush1.bf16.msra.mxu0 %v407
        %425 = vmatprep.subr.bf16.mxu0 0
        %426 = vmatpush2.bf16.msra.mxu0 0
        %427 = vmatprep.subr.bf16.mxu0 0
        %428 = vmatpush2.bf16.msra.mxu0 0
        %429 = vmatprep.subr.bf16.mxu0 0
        %430 = vmatpush2.bf16.msra.mxu0 0
        %431 = vmatprep.subr.bf16.mxu0 0
        %432 = vmatpush2.bf16.msra.mxu0 0
        %433 = vmatprep.subr.bf16.mxu0 0
        %434 = vmatpush2.bf16.msra.mxu0 0
        %435 = vmatprep.subr.bf16.mxu0 0
        %436 = vmatpush2.bf16.msra.mxu0 0
        %437 = vmatprep.subr.bf16.mxu0 0
        %438 = vmatpush2.bf16.msra.mxu0 0
        %439 = vmatprep.subr.bf16.mxu0 0
        %440 = vmatpush2.bf16.msra.mxu0 0
        %441 = vmatprep.mubr.bf16.mxu0 0
        %442 = vmatmul.mubr.bf16.gmra.mxu0 %v403
        %v443 = vpop.f32.mrf.mxu0
        %v444 = vadd.f32 0.0, %v443
        %v445 = vpop.f32.mrf.mxu0
        %v446 = vpop.f32.mrf.mxu0
        %v447 = vpop.f32.mrf.mxu0
        %448 = vdwg.mxu0
        %v449 = vmul.f32 %v444, %v398
        %450 = vst.msk [vmem:[%s260] sm:$0xff] %vm342, %v449
        %451 = vrot.lane.b32.xlu0 %v331, 120
        %v452 = vpop.permute.xlu0 %451
        %453 = vrot.lane.b32.xlu0 %v331, 88
        %v454 = vpop.permute.xlu0 %453
        %v456 = vsel %vm342, %v452, 0
        %v459 = vsel %vm342, %v454, 0
        %461 = vmatprep.subr.bf16.mxu0 0
        %462 = vmatpush1.bf16.xpose.msra.mxu0 0
        %463 = vmatprep.subr.bf16.mxu0 0
        %464 = vmatpush1.bf16.xpose.msra.mxu0 0
        %465 = vmatprep.subr.bf16.mxu0 0
        %466 = vmatpush1.bf16.xpose.msra.mxu0 0
        %467 = vmatprep.subr.bf16.mxu0 0
        %468 = vmatpush1.bf16.xpose.msra.mxu0 0
        %469 = vmatprep.subr.bf16.mxu0 0
        %470 = vmatpush1.bf16.xpose.msra.mxu0 0
        %471 = vmatprep.subr.bf16.mxu0 0
        %472 = vmatpush1.bf16.xpose.msra.mxu0 0
        %473 = vmatprep.subr.bf16.mxu0 0
        %474 = vmatpush1.bf16.xpose.msra.mxu0 0
        %475 = vmatprep.subr.bf16.mxu0 0
        %476 = vmatpush1.bf16.xpose.msra.mxu0 %v459
        %477 = vmatprep.subr.bf16.mxu0 0
        %478 = vmatpush2.bf16.xpose.msra.mxu0 0
        %479 = vmatprep.subr.bf16.mxu0 0
        %480 = vmatpush2.bf16.xpose.msra.mxu0 0
        %481 = vmatprep.subr.bf16.mxu0 0
        %482 = vmatpush2.bf16.xpose.msra.mxu0 0
        %483 = vmatprep.subr.bf16.mxu0 0
        %484 = vmatpush2.bf16.xpose.msra.mxu0 0
        %485 = vmatprep.subr.bf16.mxu0 0
        %486 = vmatpush2.bf16.xpose.msra.mxu0 0
        %487 = vmatprep.subr.bf16.mxu0 0
        %488 = vmatpush2.bf16.xpose.msra.mxu0 0
        %489 = vmatprep.subr.bf16.mxu0 0
        %490 = vmatpush2.bf16.xpose.msra.mxu0 0
        %491 = vmatprep.subr.bf16.mxu0 0
        %492 = vmatpush2.bf16.xpose.msra.mxu0 0
        %493 = vmatprep.mubr.bf16.mxu0 0
        %494 = vmatmul.mubr.bf16.gmra.mxu0 %v456
        %v495 = vpop.f32.mrf.mxu0
        %v496 = vadd.f32 %v337, %v495
        %v497 = vpop.f32.mrf.mxu0
        %v498 = vpop.f32.mrf.mxu0
        %v499 = vpop.f32.mrf.mxu0
        %500 = vdwg.mxu0
        %v501 = vsel %vm342, %v496, -inf
        %502 = vmax.xlane.f32.xlu0 %v501
        %v503 = vpop.xlane.xlu0 %502
        %v504 = vsub.f32 %v496, %v503
        %v505 = vmul.f32 %v504, 1.442695
        %v506 = vpow.pop %v505
        %v507 = vsel %vm342, %v506, 0.0
        %508 = vadd.xlane.f32.xlu0 %v507
        %v509 = vpop.xlane.xlu0 %508
        %v510 = vrcp.pop %v509
        %v511 = vpack.c.bf16 %v506, %v506
        %512 = vrot.lane.b32.xlu0 %v331, 56
        %v513 = vpop.permute.xlu0 %512
        %v515 = vsel %vm342, %v511, 0
        %v518 = vsel %vm405, %v513, 0
        %520 = vmatprep.subr.bf16.mxu0 0
        %521 = vmatpush1.bf16.msra.mxu0 0
        %522 = vmatprep.subr.bf16.mxu0 0
        %523 = vmatpush1.bf16.msra.mxu0 0
        %524 = vmatprep.subr.bf16.mxu0 0
        %525 = vmatpush1.bf16.msra.mxu0 0
        %526 = vmatprep.subr.bf16.mxu0 0
        %527 = vmatpush1.bf16.msra.mxu0 0
        %528 = vmatprep.subr.bf16.mxu0 0
        %529 = vmatpush1.bf16.msra.mxu0 0
        %530 = vmatprep.subr.bf16.mxu0 0
        %531 = vmatpush1.bf16.msra.mxu0 0
        %532 = vmatprep.subr.bf16.mxu0 0
        %533 = vmatpush1.bf16.msra.mxu0 0
        %534 = vmatprep.subr.bf16.mxu0 0
        %535 = vmatpush1.bf16.msra.mxu0 %v518
        %536 = vmatprep.subr.bf16.mxu0 0
        %537 = vmatpush2.bf16.msra.mxu0 0
        %538 = vmatprep.subr.bf16.mxu0 0
        %539 = vmatpush2.bf16.msra.mxu0 0
        %540 = vmatprep.subr.bf16.mxu0 0
        %541 = vmatpush2.bf16.msra.mxu0 0
        %542 = vmatprep.subr.bf16.mxu0 0
        %543 = vmatpush2.bf16.msra.mxu0 0
        %544 = vmatprep.subr.bf16.mxu0 0
        %545 = vmatpush2.bf16.msra.mxu0 0
        %546 = vmatprep.subr.bf16.mxu0 0
        %547 = vmatpush2.bf16.msra.mxu0 0
        %548 = vmatprep.subr.bf16.mxu0 0
        %549 = vmatpush2.bf16.msra.mxu0 0
        %550 = vmatprep.subr.bf16.mxu0 0
        %551 = vmatpush2.bf16.msra.mxu0 0
        %552 = vmatprep.mubr.bf16.mxu0 0
        %553 = vmatmul.mubr.bf16.gmra.mxu0 %v515
        %v554 = vpop.f32.mrf.mxu0
        %v555 = vadd.f32 0.0, %v554
        %v556 = vpop.f32.mrf.mxu0
        %v557 = vpop.f32.mrf.mxu0
        %v558 = vpop.f32.mrf.mxu0
        %559 = vdwg.mxu0
        %v560 = vmul.f32 %v555, %v510
        %562 = vrot.lane.b32.xlu0 %v560, 8
        %v563 = vpop.permute.xlu0 %562
        %vm565 = vcmask 130112
        %566 = vst.msk [vmem:[%s260] sm:$0xff] %vm565, %v563
        %567 = vrot.lane.b32.xlu0 %v331, 112
        %v568 = vpop.permute.xlu0 %567
        %569 = vrot.lane.b32.xlu0 %v331, 80
        %v570 = vpop.permute.xlu0 %569
        %v572 = vsel %vm342, %v568, 0
        %v575 = vsel %vm342, %v570, 0
        %577 = vmatprep.subr.bf16.mxu0 0
        %578 = vmatpush1.bf16.xpose.msra.mxu0 0
        %579 = vmatprep.subr.bf16.mxu0 0
        %580 = vmatpush1.bf16.xpose.msra.mxu0 0
        %581 = vmatprep.subr.bf16.mxu0 0
        %582 = vmatpush1.bf16.xpose.msra.mxu0 0
        %583 = vmatprep.subr.bf16.mxu0 0
        %584 = vmatpush1.bf16.xpose.msra.mxu0 0
        %585 = vmatprep.subr.bf16.mxu0 0
        %586 = vmatpush1.bf16.xpose.msra.mxu0 0
        %587 = vmatprep.subr.bf16.mxu0 0
        %588 = vmatpush1.bf16.xpose.msra.mxu0 0
        %589 = vmatprep.subr.bf16.mxu0 0
        %590 = vmatpush1.bf16.xpose.msra.mxu0 0
        %591 = vmatprep.subr.bf16.mxu0 0
        %592 = vmatpush1.bf16.xpose.msra.mxu0 %v575
        %593 = vmatprep.subr.bf16.mxu0 0
        %594 = vmatpush2.bf16.xpose.msra.mxu0 0
        %595 = vmatprep.subr.bf16.mxu0 0
        %596 = vmatpush2.bf16.xpose.msra.mxu0 0
        %597 = vmatprep.subr.bf16.mxu0 0
        %598 = vmatpush2.bf16.xpose.msra.mxu0 0
        %599 = vmatprep.subr.bf16.mxu0 0
        %600 = vmatpush2.bf16.xpose.msra.mxu0 0
        %601 = vmatprep.subr.bf16.mxu0 0
        %602 = vmatpush2.bf16.xpose.msra.mxu0 0
        %603 = vmatprep.subr.bf16.mxu0 0
        %604 = vmatpush2.bf16.xpose.msra.mxu0 0
        %605 = vmatprep.subr.bf16.mxu0 0
        %606 = vmatpush2.bf16.xpose.msra.mxu0 0
        %607 = vmatprep.subr.bf16.mxu0 0
        %608 = vmatpush2.bf16.xpose.msra.mxu0 0
        %609 = vmatprep.mubr.bf16.mxu0 0
        %610 = vmatmul.mubr.bf16.gmra.mxu0 %v572
        %v611 = vpop.f32.mrf.mxu0
        %v612 = vadd.f32 %v337, %v611
        %v613 = vpop.f32.mrf.mxu0
        %v614 = vpop.f32.mrf.mxu0
        %v615 = vpop.f32.mrf.mxu0
        %616 = vdwg.mxu0
        %v617 = vsel %vm342, %v612, -inf
        %618 = vmax.xlane.f32.xlu0 %v617
        %v619 = vpop.xlane.xlu0 %618
        %v620 = vsub.f32 %v612, %v619
        %v621 = vmul.f32 %v620, 1.442695
        %v622 = vpow.pop %v621
        %v623 = vsel %vm342, %v622, 0.0
        %624 = vadd.xlane.f32.xlu0 %v623
        %v625 = vpop.xlane.xlu0 %624
        %v626 = vrcp.pop %v625
        %v627 = vpack.c.bf16 %v622, %v622
        %628 = vrot.lane.b32.xlu0 %v331, 48
        %v629 = vpop.permute.xlu0 %628
        %v631 = vsel %vm342, %v627, 0
        %v634 = vsel %vm405, %v629, 0
        %636 = vmatprep.subr.bf16.mxu0 0
        %637 = vmatpush1.bf16.msra.mxu0 0
        %638 = vmatprep.subr.bf16.mxu0 0
        %639 = vmatpush1.bf16.msra.mxu0 0
        %640 = vmatprep.subr.bf16.mxu0 0
        %641 = vmatpush1.bf16.msra.mxu0 0
        %642 = vmatprep.subr.bf16.mxu0 0
        %643 = vmatpush1.bf16.msra.mxu0 0
        %644 = vmatprep.subr.bf16.mxu0 0
        %645 = vmatpush1.bf16.msra.mxu0 0
        %646 = vmatprep.subr.bf16.mxu0 0
        %647 = vmatpush1.bf16.msra.mxu0 0
        %648 = vmatprep.subr.bf16.mxu0 0
        %649 = vmatpush1.bf16.msra.mxu0 0
        %650 = vmatprep.subr.bf16.mxu0 0
        %651 = vmatpush1.bf16.msra.mxu0 %v634
        %652 = vmatprep.subr.bf16.mxu0 0
        %653 = vmatpush2.bf16.msra.mxu0 0
        %654 = vmatprep.subr.bf16.mxu0 0
        %655 = vmatpush2.bf16.msra.mxu0 0
        %656 = vmatprep.subr.bf16.mxu0 0
        %657 = vmatpush2.bf16.msra.mxu0 0
        %658 = vmatprep.subr.bf16.mxu0 0
        %659 = vmatpush2.bf16.msra.mxu0 0
        %660 = vmatprep.subr.bf16.mxu0 0
        %661 = vmatpush2.bf16.msra.mxu0 0
        %662 = vmatprep.subr.bf16.mxu0 0
        %663 = vmatpush2.bf16.msra.mxu0 0
        %664 = vmatprep.subr.bf16.mxu0 0
        %665 = vmatpush2.bf16.msra.mxu0 0
        %666 = vmatprep.subr.bf16.mxu0 0
        %667 = vmatpush2.bf16.msra.mxu0 0
        %668 = vmatprep.mubr.bf16.mxu0 0
        %669 = vmatmul.mubr.bf16.gmra.mxu0 %v631
        %v670 = vpop.f32.mrf.mxu0
        %v671 = vadd.f32 0.0, %v670
        %v672 = vpop.f32.mrf.mxu0
        %v673 = vpop.f32.mrf.mxu0
        %v674 = vpop.f32.mrf.mxu0
        %675 = vdwg.mxu0
        %v676 = vmul.f32 %v671, %v626
        %678 = vrot.lane.b32.xlu0 %v676, 16
        %v679 = vpop.permute.xlu0 %678
        %vm681 = vcmask 195712
        %682 = vst.msk [vmem:[%s260] sm:$0xff] %vm681, %v679
        %683 = vrot.lane.b32.xlu0 %v331, 104
        %v684 = vpop.permute.xlu0 %683
        %685 = vrot.lane.b32.xlu0 %v331, 72
        %v686 = vpop.permute.xlu0 %685
        %v688 = vsel %vm342, %v684, 0
        %v691 = vsel %vm342, %v686, 0
        %693 = vmatprep.subr.bf16.mxu0 0
        %694 = vmatpush1.bf16.xpose.msra.mxu0 0
        %695 = vmatprep.subr.bf16.mxu0 0
        %696 = vmatpush1.bf16.xpose.msra.mxu0 0
        %697 = vmatprep.subr.bf16.mxu0 0
        %698 = vmatpush1.bf16.xpose.msra.mxu0 0
        %699 = vmatprep.subr.bf16.mxu0 0
        %700 = vmatpush1.bf16.xpose.msra.mxu0 0
        %701 = vmatprep.subr.bf16.mxu0 0
        %702 = vmatpush1.bf16.xpose.msra.mxu0 0
        %703 = vmatprep.subr.bf16.mxu0 0
        %704 = vmatpush1.bf16.xpose.msra.mxu0 0
        %705 = vmatprep.subr.bf16.mxu0 0
        %706 = vmatpush1.bf16.xpose.msra.mxu0 0
        %707 = vmatprep.subr.bf16.mxu0 0
        %708 = vmatpush1.bf16.xpose.msra.mxu0 %v691
        %709 = vmatprep.subr.bf16.mxu0 0
        %710 = vmatpush2.bf16.xpose.msra.mxu0 0
        %711 = vmatprep.subr.bf16.mxu0 0
        %712 = vmatpush2.bf16.xpose.msra.mxu0 0
        %713 = vmatprep.subr.bf16.mxu0 0
        %714 = vmatpush2.bf16.xpose.msra.mxu0 0
        %715 = vmatprep.subr.bf16.mxu0 0
        %716 = vmatpush2.bf16.xpose.msra.mxu0 0
        %717 = vmatprep.subr.bf16.mxu0 0
        %718 = vmatpush2.bf16.xpose.msra.mxu0 0
        %719 = vmatprep.subr.bf16.mxu0 0
        %720 = vmatpush2.bf16.xpose.msra.mxu0 0
        %721 = vmatprep.subr.bf16.mxu0 0
        %722 = vmatpush2.bf16.xpose.msra.mxu0 0
        %723 = vmatprep.subr.bf16.mxu0 0
        %724 = vmatpush2.bf16.xpose.msra.mxu0 0
        %725 = vmatprep.mubr.bf16.mxu0 0
        %726 = vmatmul.mubr.bf16.gmra.mxu0 %v688
        %v727 = vpop.f32.mrf.mxu0
        %v728 = vadd.f32 %v337, %v727
        %v729 = vpop.f32.mrf.mxu0
        %v730 = vpop.f32.mrf.mxu0
        %v731 = vpop.f32.mrf.mxu0
        %732 = vdwg.mxu0
        %v733 = vsel %vm342, %v728, -inf
        %734 = vmax.xlane.f32.xlu0 %v733
        %v735 = vpop.xlane.xlu0 %734
        %v736 = vsub.f32 %v728, %v735
        %v737 = vmul.f32 %v736, 1.442695
        %v738 = vpow.pop %v737
        %v739 = vsel %vm342, %v738, 0.0
        %740 = vadd.xlane.f32.xlu0 %v739
        %v741 = vpop.xlane.xlu0 %740
        %v742 = vrcp.pop %v741
        %v743 = vpack.c.bf16 %v738, %v738
        %744 = vrot.lane.b32.xlu0 %v331, 40
        %v745 = vpop.permute.xlu0 %744
        %v747 = vsel %vm342, %v743, 0
        %v750 = vsel %vm405, %v745, 0
        %752 = vmatprep.subr.bf16.mxu0 0
        %753 = vmatpush1.bf16.msra.mxu0 0
        %754 = vmatprep.subr.bf16.mxu0 0
        %755 = vmatpush1.bf16.msra.mxu0 0
        %756 = vmatprep.subr.bf16.mxu0 0
        %757 = vmatpush1.bf16.msra.mxu0 0
        %758 = vmatprep.subr.bf16.mxu0 0
        %759 = vmatpush1.bf16.msra.mxu0 0
        %760 = vmatprep.subr.bf16.mxu0 0
        %761 = vmatpush1.bf16.msra.mxu0 0
        %762 = vmatprep.subr.bf16.mxu0 0
        %763 = vmatpush1.bf16.msra.mxu0 0
        %764 = vmatprep.subr.bf16.mxu0 0
        %765 = vmatpush1.bf16.msra.mxu0 0
        %766 = vmatprep.subr.bf16.mxu0 0
        %767 = vmatpush1.bf16.msra.mxu0 %v750
        %768 = vmatprep.subr.bf16.mxu0 0
        %769 = vmatpush2.bf16.msra.mxu0 0
        %770 = vmatprep.subr.bf16.mxu0 0
        %771 = vmatpush2.bf16.msra.mxu0 0
        %772 = vmatprep.subr.bf16.mxu0 0
        %773 = vmatpush2.bf16.msra.mxu0 0
        %774 = vmatprep.subr.bf16.mxu0 0
        %775 = vmatpush2.bf16.msra.mxu0 0
        %776 = vmatprep.subr.bf16.mxu0 0
        %777 = vmatpush2.bf16.msra.mxu0 0
        %778 = vmatprep.subr.bf16.mxu0 0
        %779 = vmatpush2.bf16.msra.mxu0 0
        %780 = vmatprep.subr.bf16.mxu0 0
        %781 = vmatpush2.bf16.msra.mxu0 0
        %782 = vmatprep.subr.bf16.mxu0 0
        %783 = vmatpush2.bf16.msra.mxu0 0
        %784 = vmatprep.mubr.bf16.mxu0 0
        %785 = vmatmul.mubr.bf16.gmra.mxu0 %v747
        %v786 = vpop.f32.mrf.mxu0
        %v787 = vadd.f32 0.0, %v786
        %v788 = vpop.f32.mrf.mxu0
        %v789 = vpop.f32.mrf.mxu0
        %v790 = vpop.f32.mrf.mxu0
        %791 = vdwg.mxu0
        %v792 = vmul.f32 %v787, %v742
        %794 = vrot.lane.b32.xlu0 %v792, 24
        %v795 = vpop.permute.xlu0 %794
        %vm797 = vcmask 261312
        %798 = vst.msk [vmem:[%s260] sm:$0xff] %vm797, %v795
        %s799 = sand.u32 %s126, 1
        %s800 = scalar_lea.sflag [#allocation4], %s799
        %s801 = sand.u32 %s126, 1
        %s802 = smul.addr %s801, 8
        %s803 = scalar_lea.vmem [#allocation8], %s802
        // Predicated region
        $region49: #{tpu_custom_call.1} parent=35 // pred_check
          %p804 = pneg %p136
        $region50: #{tpu_custom_call.1} parent=35 // pred_check_branch
          %806 = sbr.rel (%p804) target = $region52
        $region51: #{tpu_custom_call.1} parent=35 // pred_region
          %s808 = ssub.s32 128, 128
          %809 = vsyncadd %s800, %s808
          %s810 = smul.addr %s24, 128
          %s811 = scalar_lea.hbm %s4, %s810
          %s813 = sshll.u32 %s803, 4
          %s814 = int_to_ptr.vmem [resolvable:$true] %s813
          %816 = dma.vmem_to_hbm [thread:$0]  %s814, 128, %s811, %s800
        $region52: #{tpu_custom_call.1} parent=35 // pred_fallthru
          _
      $region36: #{tpu_custom_call.1} parent=5 // pred_fallthru
        _
      %p817 = scmp.le.s32.totalorder 2, %s19
      // Predicated region
      $region53: #{tpu_custom_call.1} parent=5 // pred_check
        %p818 = pneg %p817
      $region54: #{tpu_custom_call.1} parent=5 // pred_check_branch
        %820 = sbr.rel (%p818) target = $region56
      $region55: #{tpu_custom_call.1} parent=5 // pred_region
        %s821 = ssub.s32 %s19, 2
        // Predicated region
        $region57: #{tpu_custom_call.1} parent=55 // pred_check
          %p822 = pneg %p142
        $region58: #{tpu_custom_call.1} parent=55 // pred_check_branch
          %824 = sbr.rel (%p822) target = $region60
        $region59: #{tpu_custom_call.1} parent=55 // pred_region
          %s825 = sand.u32 %s127, 1
          %s826 = scalar_lea.sflag [#allocation4], %s825
          %s827 = sand.u32 %s127, 1
          %s828 = smul.addr %s827, 8
          %s829 = scalar_lea.vmem [#allocation8], %s828
          %830 = dma.done %s826, 128
        $region60: #{tpu_custom_call.1} parent=55 // pred_fallthru
          _
      $region56: #{tpu_custom_call.1} parent=5 // pred_fallthru
        _
    $region6: #{tpu_custom_call.1} parent=1 // loop_footer
      %s23 = sadd.s32 1, %s19
    $region7: #{tpu_custom_call.1} parent=1 // loop_footer_branch
      %18 = sbr.rel target = $region3
    $region8: #{tpu_custom_call.1} parent=1 // loop_exit
      _
    %831 = vsyncpa [#allocation3], 1
    %s832 = scalar_lea.sflag [#allocation3], 1
    %833 = vsyncpa %s832, 1
    %834 = vsyncpa [#allocation6], 1
    %s835 = scalar_lea.sflag [#allocation6], 1
    %836 = vsyncpa %s835, 1
    %837 = vsyncpa [#allocation4], 1
    %s838 = scalar_lea.sflag [#allocation4], 1
    %839 = vsyncpa %s838, 1

</llo_original>
